<compile_context>
chip_gen: v7x
topology: tpu7x:2x2x1
jax: 0.10.0
libtpu: 0.0.40
codegen_flags: <defaults>
</compile_context>

<pallas_src>
import math
from functools import partial

import jax
import jax.numpy as jnp
from jax.experimental import pallas as pl
from jax.experimental.pallas import tpu as pltpu


def _make_local_conv_kernel(N, K, outC):
    """Builds a kernel computing, per L-tile:
         out[n, o, l] = sum_k cols[n*K + k, l] * w[k*outC + o, l] + b[o, l]
    Per grid step:
      cols_ref: (N*K, TL)    w_ref:   (K*outC, TL)
      b_ref:    (outC, TL)   out_ref: (N, outC, TL)
    """
    def kernel(cols_ref, w_ref, b_ref, out_ref):
        bias = b_ref[...].astype(jnp.float32)                        # (outC, TL)
        accs = [jnp.zeros(bias.shape, jnp.float32) for _ in range(N)]
        # Statically-unrolled K-accumulation: only the N (outC, TL) f32
        # accumulators are live (a few vregs) -- no (N,K,outC,TL) temporary.
        for k in range(K):
            # 8-row aligned f32 slice of the weight stream (no packed-tile
            # sub-slicing, no sublane padding).
            wk = w_ref[k * outC:(k + 1) * outC, :].astype(jnp.float32)   # (outC, TL)
            for n in range(N):
                row = n * K + k
                c = cols_ref[row:row + 1, :].astype(jnp.float32)         # (1, TL)
                accs[n] = accs[n] + c * wk                               # VPU FMA filler
        for n in range(N):
            out_ref[n, :, :] = (accs[n] + bias).astype(out_ref.dtype)
    return kernel


def _unfold_cols(x, kH, kW, stride, padding, dilation, outH, outW):
    """Emulate torch.nn.functional.unfold; returns (N, K, L) with K flattened
    in (inC, kh, kw) order (channel-major, same as PyTorch) and L last."""
    N, inC, _, _ = x.shape
    sH, sW = stride
    pH, pW = padding
    dH, dW = dilation
    xp = jnp.pad(x, ((0, 0), (0, 0), (pH, pH), (pW, pW)))
    patches = []
    for kh in range(kH):
        for kw in range(kW):
            patches.append(
                xp[:, :,
                   kh * dH: kh * dH + (outH - 1) * sH + 1: sH,
                   kw * dW: kw * dW + (outW - 1) * sW + 1: sW])
    # (N, inC, kH*kW, outH, outW)
    patches = jnp.stack(patches, axis=2)
    return patches.reshape(N, inC * kH * kW, outH * outW)        # (N, K, L)


def prepare_local_conv_params(weight, bias):
    """One-time weight/bias re-layout; hoist/cache this outside the hot path
    so XLA does not re-transpose the (dominant, read-once) weight per call.

    weight (outH,outW,outC,inC,kH,kW) -> w2d (K*outC, L), rows = (k, o);
    bias (outC,outH,outW) -> b2d (outC, L).  Kept f32 (see header comment).
    """
    outH, outW, outC, inC, kH, kW = weight.shape
    K = inC * kH * kW
    L = outH * outW
    w2d = (weight.reshape(L, outC, K).transpose(2, 1, 0)
           .reshape(K * outC, L).astype(jnp.float32))
    if bias is None:
        b2d = jnp.zeros((outC, L), jnp.float32)
    else:
        b2d = bias.reshape(outC, L).astype(jnp.float32)
    return w2d, b2d


def _pad8(n):
    return ((n + 7) // 8) * 8


def _vmem_limit_bytes():
    """Scoped-VMEM limit derived from the actual chip (64 MiB physical on
    v7x, 128 MiB on v5e/v6e); falls back to the v7x-safe value."""
    try:
        cap = int(pltpu.get_tpu_info().vmem_capacity_bytes)
    except Exception:
        cap = 64 * 1024 * 1024
    return min(cap // 2, 64 * 1024 * 1024)


def _choose_l_tile(Lp, per_l_bytes, budget_bytes):
    """Largest 128-multiple tile dividing Lp that fits the double-buffered
    VMEM budget, preferring >=4 grid steps (2 per TensorCore on v7x keeps the
    pipeline double-buffered per core), then >=2, then whatever divides."""
    for min_steps in (4, 2, 1):
        for tl in (2048, 1024, 512, 256, 128):
            if Lp % tl == 0 and Lp // tl >= min_steps and tl * per_l_bytes <= budget_bytes:
                return tl
    return 128  # Lp is always a multiple of 128; minimal legal tile.


def _conv2d_local_core(cols2d, w2d, b2d, *, N, outC, outH, outW, K, out_dtype):
    L = outH * outW
    Lp = pl.cdiv(L, 128) * 128
    if Lp != L:
        # Lane-dense stores + pipelined grid even when L % 128 != 0.
        pad = Lp - L
        cols2d = jnp.pad(cols2d, ((0, 0), (0, pad)))
        w2d = jnp.pad(w2d, ((0, 0), (0, pad)))
        b2d = jnp.pad(b2d, ((0, 0), (0, pad)))

    itemsize = jnp.dtype(out_dtype).itemsize
    # Per-output-position VMEM bytes: double-buffered f32 input streams (with
    # (8,128) sublane padding) + double-buffered output block.  Accumulators
    # live in vregs, so there is no scratch term.
    per_l = (2 * (_pad8(N * K) + _pad8(K * outC) + _pad8(outC)) * 4
             + 2 * N * _pad8(outC) * itemsize)
    vmem_limit = _vmem_limit_bytes()
    TL = _choose_l_tile(Lp, per_l, (vmem_limit * 3) // 4)
    grid = (Lp // TL,)

    cost = pl.CostEstimate(
        flops=2 * N * K * outC * L,
        transcendentals=0,
        bytes_accessed=int(cols2d.size * 4 + w2d.size * 4 + b2d.size * 4
                           + N * outC * Lp * itemsize))

    out = pl.pallas_call(
        _make_local_conv_kernel(N, K, outC),
        out_shape=jax.ShapeDtypeStruct((N, outC, Lp), out_dtype),
        grid=grid,
        in_specs=[
            pl.BlockSpec((N * K, TL), lambda l: (0, l)),        # cols
            pl.BlockSpec((K * outC, TL), lambda l: (0, l)),     # weights
            pl.BlockSpec((outC, TL), lambda l: (0, l)),         # bias
        ],
        out_specs=pl.BlockSpec((N, outC, TL), lambda l: (0, 0, l)),
        compiler_params=pltpu.CompilerParams(
            dimension_semantics=("parallel",),
            vmem_limit_bytes=vmem_limit),
        cost_estimate=cost,
    )(cols2d, w2d, b2d)

    out = out[:, :, :L]
    # (N, outC, L) -> NCHW: pure reshape, no epilogue transpose.
    return out.reshape(N, outC, outH, outW)


def conv2d_local_prepared(x, w2d, b2d, *, kernel_size, out_shape,
                          stride=(1, 1), padding=(0, 0), dilation=(1, 1)):
    """Forward with the weight re-layout already hoisted out of the hot path."""
    kH, kW = kernel_size
    outC, outH, outW = out_shape
    N, inC, _, _ = x.shape
    K = inC * kH * kW
    # TODO(synk): the unfold is still XLA glue in front of the kernel.
    cols = _unfold_cols(x, kH, kW, stride, padding, dilation, outH, outW)
    cols2d = cols.reshape(N * K, outH * outW).astype(jnp.float32)
    return _conv2d_local_core(cols2d, w2d, b2d, N=N, outC=outC, outH=outH,
                              outW=outW, K=K, out_dtype=x.dtype)


def conv2d_local_pallas(x, weight, bias, stride=(1, 1), padding=(0, 0),
                        dilation=(1, 1)):
    """Drop-in forward matching the PyTorch Conv2dLocal module semantics."""
    outH, outW, outC, inC, kH, kW = weight.shape
    w2d, b2d = prepare_local_conv_params(weight, bias)
    return conv2d_local_prepared(x, w2d, b2d, kernel_size=(kH, kW),
                                 out_shape=(outC, outH, outW),
                                 stride=stride, padding=padding,
                                 dilation=dilation)


def conv2d_local_ref(x, weight, bias, stride, padding, dilation):
    """Pure-JAX f32 reference with exact module semantics."""
    outH, outW, outC, inC, kH, kW = weight.shape
    N = x.shape[0]
    K = inC * kH * kW
    L = outH * outW
    cols = _unfold_cols(x, kH, kW, stride, padding, dilation, outH, outW)
    w = weight.reshape(L, outC, K).astype(jnp.float32)
    out = jnp.einsum('nkl,lok->nol', cols.astype(jnp.float32), w)
    out = out.reshape(N, outC, outH, outW)
    if bias is not None:
        out = out + bias[None].astype(jnp.float32)
    return out.astype(x.dtype)


if __name__ == "__main__":
    # Module config (small, consistent with Conv2dLocal.__init__)
    in_height, in_width = 16, 16
    in_channels, out_channels = 4, 8
    kernel_size = (3, 3)
    stride = (1, 1)
    padding = (1, 1)
    dilation = (1, 1)
    batch = 2

    kH, kW = kernel_size
    out_height = int(math.floor(
        (in_height + 2 * padding[0] - dilation[0] * (kH - 1) - 1) / stride[0] + 1))
    out_width = int(math.floor(
        (in_width + 2 * padding[1] - dilation[1] * (kW - 1) - 1) / stride[1] + 1))

    # Deterministic parameter init (mirrors reset_parameters: uniform(-stdv, stdv))
    n = in_channels * kH * kW
    stdv = 1.0 / math.sqrt(n)
    key = jax.random.PRNGKey(0)
    k_x, k_w, k_b = jax.random.split(key, 3)

    x = jax.random.normal(k_x, (batch, in_channels, in_height, in_width),
                          dtype=jnp.float32)
    weight = jax.random.uniform(
        k_w, (out_height, out_width, out_channels, in_channels, kH, kW),
        minval=-stdv, maxval=stdv, dtype=jnp.float32)
    bias = jax.random.uniform(
        k_b, (out_channels, out_height, out_width),
        minval=-stdv, maxval=stdv, dtype=jnp.float32)

    # Weight re-layout hoisted out of the jitted hot path (done once, cached).
    w2d, b2d = prepare_local_conv_params(weight, bias)
    w2d, b2d = jax.block_until_ready((w2d, b2d))

    fwd = jax.jit(partial(conv2d_local_prepared,
                          kernel_size=kernel_size,
                          out_shape=(out_channels, out_height, out_width),
                          stride=stride, padding=padding, dilation=dilation))
    out = jax.block_until_ready(fwd(x, w2d, b2d))
    assert out.shape == (batch, out_channels, out_height, out_width)

    # f32 end-to-end -> tight check against exact module semantics.
    ref = conv2d_local_ref(x, weight, bias, stride, padding, dilation)
    assert jnp.allclose(out, ref, atol=2e-5, rtol=2e-5), \
        float(jnp.max(jnp.abs(out - ref)))

    print("KERNEL_OK")
</pallas_src>

<mosaic_0001>
module attributes {stable_mosaic.version = 11 : i64} {
  func.func @kernel(%arg0: i32, %arg1: memref<72x128xf32, #tpu.memory_space<vmem>>, %arg2: memref<288x128xf32, #tpu.memory_space<vmem>>, %arg3: memref<8x128xf32, #tpu.memory_space<vmem>>, %arg4: memref<2x8x128xf32, #tpu.memory_space<vmem>>) attributes {dimension_semantics = [#tpu.dimension_semantics<parallel>], iteration_bounds = array<i64: 2>, scalar_prefetch = 0 : i64, scratch_operands = 0 : i64, tpu.core_type = #tpu.core_type<tc>, window_params = [{transform_indices = @transform_0, window_bounds = array<i64: 72, 128>}, {transform_indices = @transform_1, window_bounds = array<i64: 288, 128>}, {transform_indices = @transform_2, window_bounds = array<i64: 8, 128>}, {transform_indices = @transform_3, window_bounds = array<i64: 2, 8, 128>}]} {
    %c0 = arith.constant 0 : index
    %c0_0 = arith.constant 0 : index
    %0 = vector.load %arg3[%c0, %c0_0] : memref<8x128xf32, #tpu.memory_space<vmem>>, vector<8x128xf32>
    %cst = arith.constant 0.000000e+00 : f32
    %1 = vector.broadcast %cst : f32 to vector<8x128xf32>
    %cst_1 = arith.constant 0.000000e+00 : f32
    %2 = vector.broadcast %cst_1 : f32 to vector<8x128xf32>
    %c0_2 = arith.constant 0 : index
    %c0_3 = arith.constant 0 : index
    %3 = vector.load %arg2[%c0_2, %c0_3] : memref<288x128xf32, #tpu.memory_space<vmem>>, vector<8x128xf32>
    %c0_4 = arith.constant 0 : index
    %c0_5 = arith.constant 0 : index
    %4 = vector.load %arg1[%c0_4, %c0_5] : memref<72x128xf32, #tpu.memory_space<vmem>>, vector<1x128xf32>
    %5 = vector.broadcast %4 : vector<1x128xf32> to vector<8x128xf32>
    %6 = arith.mulf %5, %3 : vector<8x128xf32>
    %7 = arith.addf %1, %6 : vector<8x128xf32>
    %c36 = arith.constant 36 : index
    %c0_6 = arith.constant 0 : index
    %8 = vector.load %arg1[%c36, %c0_6] : memref<72x128xf32, #tpu.memory_space<vmem>>, vector<1x128xf32>
    %9 = vector.broadcast %8 : vector<1x128xf32> to vector<8x128xf32>
    %10 = arith.mulf %9, %3 : vector<8x128xf32>
    %11 = arith.addf %2, %10 : vector<8x128xf32>
    %c8 = arith.constant 8 : index
    %c0_7 = arith.constant 0 : index
    %12 = vector.load %arg2[%c8, %c0_7] : memref<288x128xf32, #tpu.memory_space<vmem>>, vector<8x128xf32>
    %c1 = arith.constant 1 : index
    %c0_8 = arith.constant 0 : index
    %13 = vector.load %arg1[%c1, %c0_8] : memref<72x128xf32, #tpu.memory_space<vmem>>, vector<1x128xf32>
    %14 = vector.broadcast %13 : vector<1x128xf32> to vector<8x128xf32>
    %15 = arith.mulf %14, %12 : vector<8x128xf32>
    %16 = arith.addf %7, %15 : vector<8x128xf32>
    %c37 = arith.constant 37 : index
    %c0_9 = arith.constant 0 : index
    %17 = vector.load %arg1[%c37, %c0_9] : memref<72x128xf32, #tpu.memory_space<vmem>>, vector<1x128xf32>
    %18 = vector.broadcast %17 : vector<1x128xf32> to vector<8x128xf32>
    %19 = arith.mulf %18, %12 : vector<8x128xf32>
    %20 = arith.addf %11, %19 : vector<8x128xf32>
    %c16 = arith.constant 16 : index
    %c0_10 = arith.constant 0 : index
    %21 = vector.load %arg2[%c16, %c0_10] : memref<288x128xf32, #tpu.memory_space<vmem>>, vector<8x128xf32>
    %c2 = arith.constant 2 : index
    %c0_11 = arith.constant 0 : index
    %22 = vector.load %arg1[%c2, %c0_11] : memref<72x128xf32, #tpu.memory_space<vmem>>, vector<1x128xf32>
    %23 = vector.broadcast %22 : vector<1x128xf32> to vector<8x128xf32>
    %24 = arith.mulf %23, %21 : vector<8x128xf32>
    %25 = arith.addf %16, %24 : vector<8x128xf32>
    %c38 = arith.constant 38 : index
    %c0_12 = arith.constant 0 : index
    %26 = vector.load %arg1[%c38, %c0_12] : memref<72x128xf32, #tpu.memory_space<vmem>>, vector<1x128xf32>
    %27 = vector.broadcast %26 : vector<1x128xf32> to vector<8x128xf32>
    %28 = arith.mulf %27, %21 : vector<8x128xf32>
    %29 = arith.addf %20, %28 : vector<8x128xf32>
    %c24 = arith.constant 24 : index
    %c0_13 = arith.constant 0 : index
    %30 = vector.load %arg2[%c24, %c0_13] : memref<288x128xf32, #tpu.memory_space<vmem>>, vector<8x128xf32>
    %c3 = arith.constant 3 : index
    %c0_14 = arith.constant 0 : index
    %31 = vector.load %arg1[%c3, %c0_14] : memref<72x128xf32, #tpu.memory_space<vmem>>, vector<1x128xf32>
    %32 = vector.broadcast %31 : vector<1x128xf32> to vector<8x128xf32>
    %33 = arith.mulf %32, %30 : vector<8x128xf32>
    %34 = arith.addf %25, %33 : vector<8x128xf32>
    %c39 = arith.constant 39 : index
    %c0_15 = arith.constant 0 : index
    %35 = vector.load %arg1[%c39, %c0_15] : memref<72x128xf32, #tpu.memory_space<vmem>>, vector<1x128xf32>
    %36 = vector.broadcast %35 : vector<1x128xf32> to vector<8x128xf32>
    %37 = arith.mulf %36, %30 : vector<8x128xf32>
    %38 = arith.addf %29, %37 : vector<8x128xf32>
    %c32 = arith.constant 32 : index
    %c0_16 = arith.constant 0 : index
    %39 = vector.load %arg2[%c32, %c0_16] : memref<288x128xf32, #tpu.memory_space<vmem>>, vector<8x128xf32>
    %c4 = arith.constant 4 : index
    %c0_17 = arith.constant 0 : index
    %40 = vector.load %arg1[%c4, %c0_17] : memref<72x128xf32, #tpu.memory_space<vmem>>, vector<1x128xf32>
    %41 = vector.broadcast %40 : vector<1x128xf32> to vector<8x128xf32>
    %42 = arith.mulf %41, %39 : vector<8x128xf32>
    %43 = arith.addf %34, %42 : vector<8x128xf32>
    %c40 = arith.constant 40 : index
    %c0_18 = arith.constant 0 : index
    %44 = vector.load %arg1[%c40, %c0_18] : memref<72x128xf32, #tpu.memory_space<vmem>>, vector<1x128xf32>
    %45 = vector.broadcast %44 : vector<1x128xf32> to vector<8x128xf32>
    %46 = arith.mulf %45, %39 : vector<8x128xf32>
    %47 = arith.addf %38, %46 : vector<8x128xf32>
    %c40_19 = arith.constant 40 : index
    %c0_20 = arith.constant 0 : index
    %48 = vector.load %arg2[%c40_19, %c0_20] : memref<288x128xf32, #tpu.memory_space<vmem>>, vector<8x128xf32>
    %c5 = arith.constant 5 : index
    %c0_21 = arith.constant 0 : index
    %49 = vector.load %arg1[%c5, %c0_21] : memref<72x128xf32, #tpu.memory_space<vmem>>, vector<1x128xf32>
    %50 = vector.broadcast %49 : vector<1x128xf32> to vector<8x128xf32>
    %51 = arith.mulf %50, %48 : vector<8x128xf32>
    %52 = arith.addf %43, %51 : vector<8x128xf32>
    %c41 = arith.constant 41 : index
    %c0_22 = arith.constant 0 : index
    %53 = vector.load %arg1[%c41, %c0_22] : memref<72x128xf32, #tpu.memory_space<vmem>>, vector<1x128xf32>
    %54 = vector.broadcast %53 : vector<1x128xf32> to vector<8x128xf32>
    %55 = arith.mulf %54, %48 : vector<8x128xf32>
    %56 = arith.addf %47, %55 : vector<8x128xf32>
    %c48 = arith.constant 48 : index
    %c0_23 = arith.constant 0 : index
    %57 = vector.load %arg2[%c48, %c0_23] : memref<288x128xf32, #tpu.memory_space<vmem>>, vector<8x128xf32>
    %c6 = arith.constant 6 : index
    %c0_24 = arith.constant 0 : index
    %58 = vector.load %arg1[%c6, %c0_24] : memref<72x128xf32, #tpu.memory_space<vmem>>, vector<1x128xf32>
    %59 = vector.broadcast %58 : vector<1x128xf32> to vector<8x128xf32>
    %60 = arith.mulf %59, %57 : vector<8x128xf32>
    %61 = arith.addf %52, %60 : vector<8x128xf32>
    %c42 = arith.constant 42 : index
    %c0_25 = arith.constant 0 : index
    %62 = vector.load %arg1[%c42, %c0_25] : memref<72x128xf32, #tpu.memory_space<vmem>>, vector<1x128xf32>
    %63 = vector.broadcast %62 : vector<1x128xf32> to vector<8x128xf32>
    %64 = arith.mulf %63, %57 : vector<8x128xf32>
    %65 = arith.addf %56, %64 : vector<8x128xf32>
    %c56 = arith.constant 56 : index
    %c0_26 = arith.constant 0 : index
    %66 = vector.load %arg2[%c56, %c0_26] : memref<288x128xf32, #tpu.memory_space<vmem>>, vector<8x128xf32>
    %c7 = arith.constant 7 : index
    %c0_27 = arith.constant 0 : index
    %67 = vector.load %arg1[%c7, %c0_27] : memref<72x128xf32, #tpu.memory_space<vmem>>, vector<1x128xf32>
    %68 = vector.broadcast %67 : vector<1x128xf32> to vector<8x128xf32>
    %69 = arith.mulf %68, %66 : vector<8x128xf32>
    %70 = arith.addf %61, %69 : vector<8x128xf32>
    %c43 = arith.constant 43 : index
    %c0_28 = arith.constant 0 : index
    %71 = vector.load %arg1[%c43, %c0_28] : memref<72x128xf32, #tpu.memory_space<vmem>>, vector<1x128xf32>
    %72 = vector.broadcast %71 : vector<1x128xf32> to vector<8x128xf32>
    %73 = arith.mulf %72, %66 : vector<8x128xf32>
    %74 = arith.addf %65, %73 : vector<8x128xf32>
    %c64 = arith.constant 64 : index
    %c0_29 = arith.constant 0 : index
    %75 = vector.load %arg2[%c64, %c0_29] : memref<288x128xf32, #tpu.memory_space<vmem>>, vector<8x128xf32>
    %c8_30 = arith.constant 8 : index
    %c0_31 = arith.constant 0 : index
    %76 = vector.load %arg1[%c8_30, %c0_31] : memref<72x128xf32, #tpu.memory_space<vmem>>, vector<1x128xf32>
    %77 = vector.broadcast %76 : vector<1x128xf32> to vector<8x128xf32>
    %78 = arith.mulf %77, %75 : vector<8x128xf32>
    %79 = arith.addf %70, %78 : vector<8x128xf32>
    %c44 = arith.constant 44 : index
    %c0_32 = arith.constant 0 : index
    %80 = vector.load %arg1[%c44, %c0_32] : memref<72x128xf32, #tpu.memory_space<vmem>>, vector<1x128xf32>
    %81 = vector.broadcast %80 : vector<1x128xf32> to vector<8x128xf32>
    %82 = arith.mulf %81, %75 : vector<8x128xf32>
    %83 = arith.addf %74, %82 : vector<8x128xf32>
    %c72 = arith.constant 72 : index
    %c0_33 = arith.constant 0 : index
    %84 = vector.load %arg2[%c72, %c0_33] : memref<288x128xf32, #tpu.memory_space<vmem>>, vector<8x128xf32>
    %c9 = arith.constant 9 : index
    %c0_34 = arith.constant 0 : index
    %85 = vector.load %arg1[%c9, %c0_34] : memref<72x128xf32, #tpu.memory_space<vmem>>, vector<1x128xf32>
    %86 = vector.broadcast %85 : vector<1x128xf32> to vector<8x128xf32>
    %87 = arith.mulf %86, %84 : vector<8x128xf32>
    %88 = arith.addf %79, %87 : vector<8x128xf32>
    %c45 = arith.constant 45 : index
    %c0_35 = arith.constant 0 : index
    %89 = vector.load %arg1[%c45, %c0_35] : memref<72x128xf32, #tpu.memory_space<vmem>>, vector<1x128xf32>
    %90 = vector.broadcast %89 : vector<1x128xf32> to vector<8x128xf32>
    %91 = arith.mulf %90, %84 : vector<8x128xf32>
    %92 = arith.addf %83, %91 : vector<8x128xf32>
    %c80 = arith.constant 80 : index
    %c0_36 = arith.constant 0 : index
    %93 = vector.load %arg2[%c80, %c0_36] : memref<288x128xf32, #tpu.memory_space<vmem>>, vector<8x128xf32>
    %c10 = arith.constant 10 : index
    %c0_37 = arith.constant 0 : index
    %94 = vector.load %arg1[%c10, %c0_37] : memref<72x128xf32, #tpu.memory_space<vmem>>, vector<1x128xf32>
    %95 = vector.broadcast %94 : vector<1x128xf32> to vector<8x128xf32>
    %96 = arith.mulf %95, %93 : vector<8x128xf32>
    %97 = arith.addf %88, %96 : vector<8x128xf32>
    %c46 = arith.constant 46 : index
    %c0_38 = arith.constant 0 : index
    %98 = vector.load %arg1[%c46, %c0_38] : memref<72x128xf32, #tpu.memory_space<vmem>>, vector<1x128xf32>
    %99 = vector.broadcast %98 : vector<1x128xf32> to vector<8x128xf32>
    %100 = arith.mulf %99, %93 : vector<8x128xf32>
    %101 = arith.addf %92, %100 : vector<8x128xf32>
    %c88 = arith.constant 88 : index
    %c0_39 = arith.constant 0 : index
    %102 = vector.load %arg2[%c88, %c0_39] : memref<288x128xf32, #tpu.memory_space<vmem>>, vector<8x128xf32>
    %c11 = arith.constant 11 : index
    %c0_40 = arith.constant 0 : index
    %103 = vector.load %arg1[%c11, %c0_40] : memref<72x128xf32, #tpu.memory_space<vmem>>, vector<1x128xf32>
    %104 = vector.broadcast %103 : vector<1x128xf32> to vector<8x128xf32>
    %105 = arith.mulf %104, %102 : vector<8x128xf32>
    %106 = arith.addf %97, %105 : vector<8x128xf32>
    %c47 = arith.constant 47 : index
    %c0_41 = arith.constant 0 : index
    %107 = vector.load %arg1[%c47, %c0_41] : memref<72x128xf32, #tpu.memory_space<vmem>>, vector<1x128xf32>
    %108 = vector.broadcast %107 : vector<1x128xf32> to vector<8x128xf32>
    %109 = arith.mulf %108, %102 : vector<8x128xf32>
    %110 = arith.addf %101, %109 : vector<8x128xf32>
    %c96 = arith.constant 96 : index
    %c0_42 = arith.constant 0 : index
    %111 = vector.load %arg2[%c96, %c0_42] : memref<288x128xf32, #tpu.memory_space<vmem>>, vector<8x128xf32>
    %c12 = arith.constant 12 : index
    %c0_43 = arith.constant 0 : index
    %112 = vector.load %arg1[%c12, %c0_43] : memref<72x128xf32, #tpu.memory_space<vmem>>, vector<1x128xf32>
    %113 = vector.broadcast %112 : vector<1x128xf32> to vector<8x128xf32>
    %114 = arith.mulf %113, %111 : vector<8x128xf32>
    %115 = arith.addf %106, %114 : vector<8x128xf32>
    %c48_44 = arith.constant 48 : index
    %c0_45 = arith.constant 0 : index
    %116 = vector.load %arg1[%c48_44, %c0_45] : memref<72x128xf32, #tpu.memory_space<vmem>>, vector<1x128xf32>
    %117 = vector.broadcast %116 : vector<1x128xf32> to vector<8x128xf32>
    %118 = arith.mulf %117, %111 : vector<8x128xf32>
    %119 = arith.addf %110, %118 : vector<8x128xf32>
    %c104 = arith.constant 104 : index
    %c0_46 = arith.constant 0 : index
    %120 = vector.load %arg2[%c104, %c0_46] : memref<288x128xf32, #tpu.memory_space<vmem>>, vector<8x128xf32>
    %c13 = arith.constant 13 : index
    %c0_47 = arith.constant 0 : index
    %121 = vector.load %arg1[%c13, %c0_47] : memref<72x128xf32, #tpu.memory_space<vmem>>, vector<1x128xf32>
    %122 = vector.broadcast %121 : vector<1x128xf32> to vector<8x128xf32>
    %123 = arith.mulf %122, %120 : vector<8x128xf32>
    %124 = arith.addf %115, %123 : vector<8x128xf32>
    %c49 = arith.constant 49 : index
    %c0_48 = arith.constant 0 : index
    %125 = vector.load %arg1[%c49, %c0_48] : memref<72x128xf32, #tpu.memory_space<vmem>>, vector<1x128xf32>
    %126 = vector.broadcast %125 : vector<1x128xf32> to vector<8x128xf32>
    %127 = arith.mulf %126, %120 : vector<8x128xf32>
    %128 = arith.addf %119, %127 : vector<8x128xf32>
    %c112 = arith.constant 112 : index
    %c0_49 = arith.constant 0 : index
    %129 = vector.load %arg2[%c112, %c0_49] : memref<288x128xf32, #tpu.memory_space<vmem>>, vector<8x128xf32>
    %c14 = arith.constant 14 : index
    %c0_50 = arith.constant 0 : index
    %130 = vector.load %arg1[%c14, %c0_50] : memref<72x128xf32, #tpu.memory_space<vmem>>, vector<1x128xf32>
    %131 = vector.broadcast %130 : vector<1x128xf32> to vector<8x128xf32>
    %132 = arith.mulf %131, %129 : vector<8x128xf32>
    %133 = arith.addf %124, %132 : vector<8x128xf32>
    %c50 = arith.constant 50 : index
    %c0_51 = arith.constant 0 : index
    %134 = vector.load %arg1[%c50, %c0_51] : memref<72x128xf32, #tpu.memory_space<vmem>>, vector<1x128xf32>
    %135 = vector.broadcast %134 : vector<1x128xf32> to vector<8x128xf32>
    %136 = arith.mulf %135, %129 : vector<8x128xf32>
    %137 = arith.addf %128, %136 : vector<8x128xf32>
    %c120 = arith.constant 120 : index
    %c0_52 = arith.constant 0 : index
    %138 = vector.load %arg2[%c120, %c0_52] : memref<288x128xf32, #tpu.memory_space<vmem>>, vector<8x128xf32>
    %c15 = arith.constant 15 : index
    %c0_53 = arith.constant 0 : index
    %139 = vector.load %arg1[%c15, %c0_53] : memref<72x128xf32, #tpu.memory_space<vmem>>, vector<1x128xf32>
    %140 = vector.broadcast %139 : vector<1x128xf32> to vector<8x128xf32>
    %141 = arith.mulf %140, %138 : vector<8x128xf32>
    %142 = arith.addf %133, %141 : vector<8x128xf32>
    %c51 = arith.constant 51 : index
    %c0_54 = arith.constant 0 : index
    %143 = vector.load %arg1[%c51, %c0_54] : memref<72x128xf32, #tpu.memory_space<vmem>>, vector<1x128xf32>
    %144 = vector.broadcast %143 : vector<1x128xf32> to vector<8x128xf32>
    %145 = arith.mulf %144, %138 : vector<8x128xf32>
    %146 = arith.addf %137, %145 : vector<8x128xf32>
    %c128 = arith.constant 128 : index
    %c0_55 = arith.constant 0 : index
    %147 = vector.load %arg2[%c128, %c0_55] : memref<288x128xf32, #tpu.memory_space<vmem>>, vector<8x128xf32>
    %c16_56 = arith.constant 16 : index
    %c0_57 = arith.constant 0 : index
    %148 = vector.load %arg1[%c16_56, %c0_57] : memref<72x128xf32, #tpu.memory_space<vmem>>, vector<1x128xf32>
    %149 = vector.broadcast %148 : vector<1x128xf32> to vector<8x128xf32>
    %150 = arith.mulf %149, %147 : vector<8x128xf32>
    %151 = arith.addf %142, %150 : vector<8x128xf32>
    %c52 = arith.constant 52 : index
    %c0_58 = arith.constant 0 : index
    %152 = vector.load %arg1[%c52, %c0_58] : memref<72x128xf32, #tpu.memory_space<vmem>>, vector<1x128xf32>
    %153 = vector.broadcast %152 : vector<1x128xf32> to vector<8x128xf32>
    %154 = arith.mulf %153, %147 : vector<8x128xf32>
    %155 = arith.addf %146, %154 : vector<8x128xf32>
    %c136 = arith.constant 136 : index
    %c0_59 = arith.constant 0 : index
    %156 = vector.load %arg2[%c136, %c0_59] : memref<288x128xf32, #tpu.memory_space<vmem>>, vector<8x128xf32>
    %c17 = arith.constant 17 : index
    %c0_60 = arith.constant 0 : index
    %157 = vector.load %arg1[%c17, %c0_60] : memref<72x128xf32, #tpu.memory_space<vmem>>, vector<1x128xf32>
    %158 = vector.broadcast %157 : vector<1x128xf32> to vector<8x128xf32>
    %159 = arith.mulf %158, %156 : vector<8x128xf32>
    %160 = arith.addf %151, %159 : vector<8x128xf32>
    %c53 = arith.constant 53 : index
    %c0_61 = arith.constant 0 : index
    %161 = vector.load %arg1[%c53, %c0_61] : memref<72x128xf32, #tpu.memory_space<vmem>>, vector<1x128xf32>
    %162 = vector.broadcast %161 : vector<1x128xf32> to vector<8x128xf32>
    %163 = arith.mulf %162, %156 : vector<8x128xf32>
    %164 = arith.addf %155, %163 : vector<8x128xf32>
    %c144 = arith.constant 144 : index
    %c0_62 = arith.constant 0 : index
    %165 = vector.load %arg2[%c144, %c0_62] : memref<288x128xf32, #tpu.memory_space<vmem>>, vector<8x128xf32>
    %c18 = arith.constant 18 : index
    %c0_63 = arith.constant 0 : index
    %166 = vector.load %arg1[%c18, %c0_63] : memref<72x128xf32, #tpu.memory_space<vmem>>, vector<1x128xf32>
    %167 = vector.broadcast %166 : vector<1x128xf32> to vector<8x128xf32>
    %168 = arith.mulf %167, %165 : vector<8x128xf32>
    %169 = arith.addf %160, %168 : vector<8x128xf32>
    %c54 = arith.constant 54 : index
    %c0_64 = arith.constant 0 : index
    %170 = vector.load %arg1[%c54, %c0_64] : memref<72x128xf32, #tpu.memory_space<vmem>>, vector<1x128xf32>
    %171 = vector.broadcast %170 : vector<1x128xf32> to vector<8x128xf32>
    %172 = arith.mulf %171, %165 : vector<8x128xf32>
    %173 = arith.addf %164, %172 : vector<8x128xf32>
    %c152 = arith.constant 152 : index
    %c0_65 = arith.constant 0 : index
    %174 = vector.load %arg2[%c152, %c0_65] : memref<288x128xf32, #tpu.memory_space<vmem>>, vector<8x128xf32>
    %c19 = arith.constant 19 : index
    %c0_66 = arith.constant 0 : index
    %175 = vector.load %arg1[%c19, %c0_66] : memref<72x128xf32, #tpu.memory_space<vmem>>, vector<1x128xf32>
    %176 = vector.broadcast %175 : vector<1x128xf32> to vector<8x128xf32>
    %177 = arith.mulf %176, %174 : vector<8x128xf32>
    %178 = arith.addf %169, %177 : vector<8x128xf32>
    %c55 = arith.constant 55 : index
    %c0_67 = arith.constant 0 : index
    %179 = vector.load %arg1[%c55, %c0_67] : memref<72x128xf32, #tpu.memory_space<vmem>>, vector<1x128xf32>
    %180 = vector.broadcast %179 : vector<1x128xf32> to vector<8x128xf32>
    %181 = arith.mulf %180, %174 : vector<8x128xf32>
    %182 = arith.addf %173, %181 : vector<8x128xf32>
    %c160 = arith.constant 160 : index
    %c0_68 = arith.constant 0 : index
    %183 = vector.load %arg2[%c160, %c0_68] : memref<288x128xf32, #tpu.memory_space<vmem>>, vector<8x128xf32>
    %c20 = arith.constant 20 : index
    %c0_69 = arith.constant 0 : index
    %184 = vector.load %arg1[%c20, %c0_69] : memref<72x128xf32, #tpu.memory_space<vmem>>, vector<1x128xf32>
    %185 = vector.broadcast %184 : vector<1x128xf32> to vector<8x128xf32>
    %186 = arith.mulf %185, %183 : vector<8x128xf32>
    %187 = arith.addf %178, %186 : vector<8x128xf32>
    %c56_70 = arith.constant 56 : index
    %c0_71 = arith.constant 0 : index
    %188 = vector.load %arg1[%c56_70, %c0_71] : memref<72x128xf32, #tpu.memory_space<vmem>>, vector<1x128xf32>
    %189 = vector.broadcast %188 : vector<1x128xf32> to vector<8x128xf32>
    %190 = arith.mulf %189, %183 : vector<8x128xf32>
    %191 = arith.addf %182, %190 : vector<8x128xf32>
    %c168 = arith.constant 168 : index
    %c0_72 = arith.constant 0 : index
    %192 = vector.load %arg2[%c168, %c0_72] : memref<288x128xf32, #tpu.memory_space<vmem>>, vector<8x128xf32>
    %c21 = arith.constant 21 : index
    %c0_73 = arith.constant 0 : index
    %193 = vector.load %arg1[%c21, %c0_73] : memref<72x128xf32, #tpu.memory_space<vmem>>, vector<1x128xf32>
    %194 = vector.broadcast %193 : vector<1x128xf32> to vector<8x128xf32>
    %195 = arith.mulf %194, %192 : vector<8x128xf32>
    %196 = arith.addf %187, %195 : vector<8x128xf32>
    %c57 = arith.constant 57 : index
    %c0_74 = arith.constant 0 : index
    %197 = vector.load %arg1[%c57, %c0_74] : memref<72x128xf32, #tpu.memory_space<vmem>>, vector<1x128xf32>
    %198 = vector.broadcast %197 : vector<1x128xf32> to vector<8x128xf32>
    %199 = arith.mulf %198, %192 : vector<8x128xf32>
    %200 = arith.addf %191, %199 : vector<8x128xf32>
    %c176 = arith.constant 176 : index
    %c0_75 = arith.constant 0 : index
    %201 = vector.load %arg2[%c176, %c0_75] : memref<288x128xf32, #tpu.memory_space<vmem>>, vector<8x128xf32>
    %c22 = arith.constant 22 : index
    %c0_76 = arith.constant 0 : index
    %202 = vector.load %arg1[%c22, %c0_76] : memref<72x128xf32, #tpu.memory_space<vmem>>, vector<1x128xf32>
    %203 = vector.broadcast %202 : vector<1x128xf32> to vector<8x128xf32>
    %204 = arith.mulf %203, %201 : vector<8x128xf32>
    %205 = arith.addf %196, %204 : vector<8x128xf32>
    %c58 = arith.constant 58 : index
    %c0_77 = arith.constant 0 : index
    %206 = vector.load %arg1[%c58, %c0_77] : memref<72x128xf32, #tpu.memory_space<vmem>>, vector<1x128xf32>
    %207 = vector.broadcast %206 : vector<1x128xf32> to vector<8x128xf32>
    %208 = arith.mulf %207, %201 : vector<8x128xf32>
    %209 = arith.addf %200, %208 : vector<8x128xf32>
    %c184 = arith.constant 184 : index
    %c0_78 = arith.constant 0 : index
    %210 = vector.load %arg2[%c184, %c0_78] : memref<288x128xf32, #tpu.memory_space<vmem>>, vector<8x128xf32>
    %c23 = arith.constant 23 : index
    %c0_79 = arith.constant 0 : index
    %211 = vector.load %arg1[%c23, %c0_79] : memref<72x128xf32, #tpu.memory_space<vmem>>, vector<1x128xf32>
    %212 = vector.broadcast %211 : vector<1x128xf32> to vector<8x128xf32>
    %213 = arith.mulf %212, %210 : vector<8x128xf32>
    %214 = arith.addf %205, %213 : vector<8x128xf32>
    %c59 = arith.constant 59 : index
    %c0_80 = arith.constant 0 : index
    %215 = vector.load %arg1[%c59, %c0_80] : memref<72x128xf32, #tpu.memory_space<vmem>>, vector<1x128xf32>
    %216 = vector.broadcast %215 : vector<1x128xf32> to vector<8x128xf32>
    %217 = arith.mulf %216, %210 : vector<8x128xf32>
    %218 = arith.addf %209, %217 : vector<8x128xf32>
    %c192 = arith.constant 192 : index
    %c0_81 = arith.constant 0 : index
    %219 = vector.load %arg2[%c192, %c0_81] : memref<288x128xf32, #tpu.memory_space<vmem>>, vector<8x128xf32>
    %c24_82 = arith.constant 24 : index
    %c0_83 = arith.constant 0 : index
    %220 = vector.load %arg1[%c24_82, %c0_83] : memref<72x128xf32, #tpu.memory_space<vmem>>, vector<1x128xf32>
    %221 = vector.broadcast %220 : vector<1x128xf32> to vector<8x128xf32>
    %222 = arith.mulf %221, %219 : vector<8x128xf32>
    %223 = arith.addf %214, %222 : vector<8x128xf32>
    %c60 = arith.constant 60 : index
    %c0_84 = arith.constant 0 : index
    %224 = vector.load %arg1[%c60, %c0_84] : memref<72x128xf32, #tpu.memory_space<vmem>>, vector<1x128xf32>
    %225 = vector.broadcast %224 : vector<1x128xf32> to vector<8x128xf32>
    %226 = arith.mulf %225, %219 : vector<8x128xf32>
    %227 = arith.addf %218, %226 : vector<8x128xf32>
    %c200 = arith.constant 200 : index
    %c0_85 = arith.constant 0 : index
    %228 = vector.load %arg2[%c200, %c0_85] : memref<288x128xf32, #tpu.memory_space<vmem>>, vector<8x128xf32>
    %c25 = arith.constant 25 : index
    %c0_86 = arith.constant 0 : index
    %229 = vector.load %arg1[%c25, %c0_86] : memref<72x128xf32, #tpu.memory_space<vmem>>, vector<1x128xf32>
    %230 = vector.broadcast %229 : vector<1x128xf32> to vector<8x128xf32>
    %231 = arith.mulf %230, %228 : vector<8x128xf32>
    %232 = arith.addf %223, %231 : vector<8x128xf32>
    %c61 = arith.constant 61 : index
    %c0_87 = arith.constant 0 : index
    %233 = vector.load %arg1[%c61, %c0_87] : memref<72x128xf32, #tpu.memory_space<vmem>>, vector<1x128xf32>
    %234 = vector.broadcast %233 : vector<1x128xf32> to vector<8x128xf32>
    %235 = arith.mulf %234, %228 : vector<8x128xf32>
    %236 = arith.addf %227, %235 : vector<8x128xf32>
    %c208 = arith.constant 208 : index
    %c0_88 = arith.constant 0 : index
    %237 = vector.load %arg2[%c208, %c0_88] : memref<288x128xf32, #tpu.memory_space<vmem>>, vector<8x128xf32>
    %c26 = arith.constant 26 : index
    %c0_89 = arith.constant 0 : index
    %238 = vector.load %arg1[%c26, %c0_89] : memref<72x128xf32, #tpu.memory_space<vmem>>, vector<1x128xf32>
    %239 = vector.broadcast %238 : vector<1x128xf32> to vector<8x128xf32>
    %240 = arith.mulf %239, %237 : vector<8x128xf32>
    %241 = arith.addf %232, %240 : vector<8x128xf32>
    %c62 = arith.constant 62 : index
    %c0_90 = arith.constant 0 : index
    %242 = vector.load %arg1[%c62, %c0_90] : memref<72x128xf32, #tpu.memory_space<vmem>>, vector<1x128xf32>
    %243 = vector.broadcast %242 : vector<1x128xf32> to vector<8x128xf32>
    %244 = arith.mulf %243, %237 : vector<8x128xf32>
    %245 = arith.addf %236, %244 : vector<8x128xf32>
    %c216 = arith.constant 216 : index
    %c0_91 = arith.constant 0 : index
    %246 = vector.load %arg2[%c216, %c0_91] : memref<288x128xf32, #tpu.memory_space<vmem>>, vector<8x128xf32>
    %c27 = arith.constant 27 : index
    %c0_92 = arith.constant 0 : index
    %247 = vector.load %arg1[%c27, %c0_92] : memref<72x128xf32, #tpu.memory_space<vmem>>, vector<1x128xf32>
    %248 = vector.broadcast %247 : vector<1x128xf32> to vector<8x128xf32>
    %249 = arith.mulf %248, %246 : vector<8x128xf32>
    %250 = arith.addf %241, %249 : vector<8x128xf32>
    %c63 = arith.constant 63 : index
    %c0_93 = arith.constant 0 : index
    %251 = vector.load %arg1[%c63, %c0_93] : memref<72x128xf32, #tpu.memory_space<vmem>>, vector<1x128xf32>
    %252 = vector.broadcast %251 : vector<1x128xf32> to vector<8x128xf32>
    %253 = arith.mulf %252, %246 : vector<8x128xf32>
    %254 = arith.addf %245, %253 : vector<8x128xf32>
    %c224 = arith.constant 224 : index
    %c0_94 = arith.constant 0 : index
    %255 = vector.load %arg2[%c224, %c0_94] : memref<288x128xf32, #tpu.memory_space<vmem>>, vector<8x128xf32>
    %c28 = arith.constant 28 : index
    %c0_95 = arith.constant 0 : index
    %256 = vector.load %arg1[%c28, %c0_95] : memref<72x128xf32, #tpu.memory_space<vmem>>, vector<1x128xf32>
    %257 = vector.broadcast %256 : vector<1x128xf32> to vector<8x128xf32>
    %258 = arith.mulf %257, %255 : vector<8x128xf32>
    %259 = arith.addf %250, %258 : vector<8x128xf32>
    %c64_96 = arith.constant 64 : index
    %c0_97 = arith.constant 0 : index
    %260 = vector.load %arg1[%c64_96, %c0_97] : memref<72x128xf32, #tpu.memory_space<vmem>>, vector<1x128xf32>
    %261 = vector.broadcast %260 : vector<1x128xf32> to vector<8x128xf32>
    %262 = arith.mulf %261, %255 : vector<8x128xf32>
    %263 = arith.addf %254, %262 : vector<8x128xf32>
    %c232 = arith.constant 232 : index
    %c0_98 = arith.constant 0 : index
    %264 = vector.load %arg2[%c232, %c0_98] : memref<288x128xf32, #tpu.memory_space<vmem>>, vector<8x128xf32>
    %c29 = arith.constant 29 : index
    %c0_99 = arith.constant 0 : index
    %265 = vector.load %arg1[%c29, %c0_99] : memref<72x128xf32, #tpu.memory_space<vmem>>, vector<1x128xf32>
    %266 = vector.broadcast %265 : vector<1x128xf32> to vector<8x128xf32>
    %267 = arith.mulf %266, %264 : vector<8x128xf32>
    %268 = arith.addf %259, %267 : vector<8x128xf32>
    %c65 = arith.constant 65 : index
    %c0_100 = arith.constant 0 : index
    %269 = vector.load %arg1[%c65, %c0_100] : memref<72x128xf32, #tpu.memory_space<vmem>>, vector<1x128xf32>
    %270 = vector.broadcast %269 : vector<1x128xf32> to vector<8x128xf32>
    %271 = arith.mulf %270, %264 : vector<8x128xf32>
    %272 = arith.addf %263, %271 : vector<8x128xf32>
    %c240 = arith.constant 240 : index
    %c0_101 = arith.constant 0 : index
    %273 = vector.load %arg2[%c240, %c0_101] : memref<288x128xf32, #tpu.memory_space<vmem>>, vector<8x128xf32>
    %c30 = arith.constant 30 : index
    %c0_102 = arith.constant 0 : index
    %274 = vector.load %arg1[%c30, %c0_102] : memref<72x128xf32, #tpu.memory_space<vmem>>, vector<1x128xf32>
    %275 = vector.broadcast %274 : vector<1x128xf32> to vector<8x128xf32>
    %276 = arith.mulf %275, %273 : vector<8x128xf32>
    %277 = arith.addf %268, %276 : vector<8x128xf32>
    %c66 = arith.constant 66 : index
    %c0_103 = arith.constant 0 : index
    %278 = vector.load %arg1[%c66, %c0_103] : memref<72x128xf32, #tpu.memory_space<vmem>>, vector<1x128xf32>
    %279 = vector.broadcast %278 : vector<1x128xf32> to vector<8x128xf32>
    %280 = arith.mulf %279, %273 : vector<8x128xf32>
    %281 = arith.addf %272, %280 : vector<8x128xf32>
    %c248 = arith.constant 248 : index
    %c0_104 = arith.constant 0 : index
    %282 = vector.load %arg2[%c248, %c0_104] : memref<288x128xf32, #tpu.memory_space<vmem>>, vector<8x128xf32>
    %c31 = arith.constant 31 : index
    %c0_105 = arith.constant 0 : index
    %283 = vector.load %arg1[%c31, %c0_105] : memref<72x128xf32, #tpu.memory_space<vmem>>, vector<1x128xf32>
    %284 = vector.broadcast %283 : vector<1x128xf32> to vector<8x128xf32>
    %285 = arith.mulf %284, %282 : vector<8x128xf32>
    %286 = arith.addf %277, %285 : vector<8x128xf32>
    %c67 = arith.constant 67 : index
    %c0_106 = arith.constant 0 : index
    %287 = vector.load %arg1[%c67, %c0_106] : memref<72x128xf32, #tpu.memory_space<vmem>>, vector<1x128xf32>
    %288 = vector.broadcast %287 : vector<1x128xf32> to vector<8x128xf32>
    %289 = arith.mulf %288, %282 : vector<8x128xf32>
    %290 = arith.addf %281, %289 : vector<8x128xf32>
    %c256 = arith.constant 256 : index
    %c0_107 = arith.constant 0 : index
    %291 = vector.load %arg2[%c256, %c0_107] : memref<288x128xf32, #tpu.memory_space<vmem>>, vector<8x128xf32>
    %c32_108 = arith.constant 32 : index
    %c0_109 = arith.constant 0 : index
    %292 = vector.load %arg1[%c32_108, %c0_109] : memref<72x128xf32, #tpu.memory_space<vmem>>, vector<1x128xf32>
    %293 = vector.broadcast %292 : vector<1x128xf32> to vector<8x128xf32>
    %294 = arith.mulf %293, %291 : vector<8x128xf32>
    %295 = arith.addf %286, %294 : vector<8x128xf32>
    %c68 = arith.constant 68 : index
    %c0_110 = arith.constant 0 : index
    %296 = vector.load %arg1[%c68, %c0_110] : memref<72x128xf32, #tpu.memory_space<vmem>>, vector<1x128xf32>
    %297 = vector.broadcast %296 : vector<1x128xf32> to vector<8x128xf32>
    %298 = arith.mulf %297, %291 : vector<8x128xf32>
    %299 = arith.addf %290, %298 : vector<8x128xf32>
    %c264 = arith.constant 264 : index
    %c0_111 = arith.constant 0 : index
    %300 = vector.load %arg2[%c264, %c0_111] : memref<288x128xf32, #tpu.memory_space<vmem>>, vector<8x128xf32>
    %c33 = arith.constant 33 : index
    %c0_112 = arith.constant 0 : index
    %301 = vector.load %arg1[%c33, %c0_112] : memref<72x128xf32, #tpu.memory_space<vmem>>, vector<1x128xf32>
    %302 = vector.broadcast %301 : vector<1x128xf32> to vector<8x128xf32>
    %303 = arith.mulf %302, %300 : vector<8x128xf32>
    %304 = arith.addf %295, %303 : vector<8x128xf32>
    %c69 = arith.constant 69 : index
    %c0_113 = arith.constant 0 : index
    %305 = vector.load %arg1[%c69, %c0_113] : memref<72x128xf32, #tpu.memory_space<vmem>>, vector<1x128xf32>
    %306 = vector.broadcast %305 : vector<1x128xf32> to vector<8x128xf32>
    %307 = arith.mulf %306, %300 : vector<8x128xf32>
    %308 = arith.addf %299, %307 : vector<8x128xf32>
    %c272 = arith.constant 272 : index
    %c0_114 = arith.constant 0 : index
    %309 = vector.load %arg2[%c272, %c0_114] : memref<288x128xf32, #tpu.memory_space<vmem>>, vector<8x128xf32>
    %c34 = arith.constant 34 : index
    %c0_115 = arith.constant 0 : index
    %310 = vector.load %arg1[%c34, %c0_115] : memref<72x128xf32, #tpu.memory_space<vmem>>, vector<1x128xf32>
    %311 = vector.broadcast %310 : vector<1x128xf32> to vector<8x128xf32>
    %312 = arith.mulf %311, %309 : vector<8x128xf32>
    %313 = arith.addf %304, %312 : vector<8x128xf32>
    %c70 = arith.constant 70 : index
    %c0_116 = arith.constant 0 : index
    %314 = vector.load %arg1[%c70, %c0_116] : memref<72x128xf32, #tpu.memory_space<vmem>>, vector<1x128xf32>
    %315 = vector.broadcast %314 : vector<1x128xf32> to vector<8x128xf32>
    %316 = arith.mulf %315, %309 : vector<8x128xf32>
    %317 = arith.addf %308, %316 : vector<8x128xf32>
    %c280 = arith.constant 280 : index
    %c0_117 = arith.constant 0 : index
    %318 = vector.load %arg2[%c280, %c0_117] : memref<288x128xf32, #tpu.memory_space<vmem>>, vector<8x128xf32>
    %c35 = arith.constant 35 : index
    %c0_118 = arith.constant 0 : index
    %319 = vector.load %arg1[%c35, %c0_118] : memref<72x128xf32, #tpu.memory_space<vmem>>, vector<1x128xf32>
    %320 = vector.broadcast %319 : vector<1x128xf32> to vector<8x128xf32>
    %321 = arith.mulf %320, %318 : vector<8x128xf32>
    %322 = arith.addf %313, %321 : vector<8x128xf32>
    %c71 = arith.constant 71 : index
    %c0_119 = arith.constant 0 : index
    %323 = vector.load %arg1[%c71, %c0_119] : memref<72x128xf32, #tpu.memory_space<vmem>>, vector<1x128xf32>
    %324 = vector.broadcast %323 : vector<1x128xf32> to vector<8x128xf32>
    %325 = arith.mulf %324, %318 : vector<8x128xf32>
    %326 = arith.addf %317, %325 : vector<8x128xf32>
    %327 = arith.addf %322, %0 : vector<8x128xf32>
    %c0_120 = arith.constant 0 : index
    %c0_121 = arith.constant 0 : index
    %c0_122 = arith.constant 0 : index
    %328 = vector.load %arg4[%c0_120, %c0_121, %c0_122] : memref<2x8x128xf32, #tpu.memory_space<vmem>>, vector<1x8x128xf32>
    %329 = vector.shape_cast %328 : vector<1x8x128xf32> to vector<8x128xf32>
    %330 = vector.shape_cast %327 : vector<8x128xf32> to vector<1x8x128xf32>
    tpu.vector_store %arg4[%c0_120, %c0_121, %c0_122], %330 {strides = array<i32>} : memref<2x8x128xf32, #tpu.memory_space<vmem>>, vector<1x8x128xf32>,
    %331 = arith.addf %326, %0 : vector<8x128xf32>
    %c1_123 = arith.constant 1 : index
    %c0_124 = arith.constant 0 : index
    %c0_125 = arith.constant 0 : index
    %332 = vector.load %arg4[%c1_123, %c0_124, %c0_125] : memref<2x8x128xf32, #tpu.memory_space<vmem>>, vector<1x8x128xf32>
    %333 = vector.shape_cast %332 : vector<1x8x128xf32> to vector<8x128xf32>
    %334 = vector.shape_cast %331 : vector<8x128xf32> to vector<1x8x128xf32>
    tpu.vector_store %arg4[%c1_123, %c0_124, %c0_125], %334 {strides = array<i32>} : memref<2x8x128xf32, #tpu.memory_space<vmem>>, vector<1x8x128xf32>,
    return
  }
  func.func @transform_0(%arg0: i32) -> (i32, i32) {
    %c0_i32 = arith.constant 0 : i32
    %c0_i32_0 = arith.constant 0 : i32
    return %c0_i32, %arg0 : i32, i32
  }
  func.func @transform_1(%arg0: i32) -> (i32, i32) {
    %c0_i32 = arith.constant 0 : i32
    %c0_i32_0 = arith.constant 0 : i32
    return %c0_i32, %arg0 : i32, i32
  }
  func.func @transform_2(%arg0: i32) -> (i32, i32) {
    %c0_i32 = arith.constant 0 : i32
    %c0_i32_0 = arith.constant 0 : i32
    return %c0_i32, %arg0 : i32, i32
  }
  func.func @transform_3(%arg0: i32) -> (i32, i32, i32) {
    %c0_i32 = arith.constant 0 : i32
    %c0_i32_0 = arith.constant 0 : i32
    %c0_i32_1 = arith.constant 0 : i32
    return %c0_i32, %c0_i32_0, %arg0 : i32, i32, i32
  }
}

</mosaic_0001>

<llo_original>
// kernel: conv2d_local_prepared.1
$region0: #{conv2d_local_prepared.1}
  #allocation0 [shape = 'u32[]', space=smem, size = 0x4, offset = 0x4, fixed_abs, tag = 'smem constant byte address 0x4 - core index']
  #allocation1 [shape = 'u32[144,128]{1,0:T(1,128)}', space=vmem, size = 0x12000, scoped, tag = 'internal scratch']
  %s0 = inlined_call_operand.vmem [shape: f32[72,256], index: 0, kind: input, shape index: {}]
  %s1 = inlined_call_operand.vmem [shape: f32[288,256], index: 1, kind: input, shape index: {}]
  %s2 = inlined_call_operand.vmem [shape: f32[8,256], index: 2, kind: input, shape index: {}]
  %s3 = inlined_call_operand.vmem [shape: f32[2,8,256], index: 3, kind: output, shape index: {}]
  %s4 = sld [smem:[#allocation0]]
  $region155: #{conv2d_local_prepared.1} parent=0
    _
  %s6 = ssub.s32 1, %s4
  %s7 = scalar_select 0, %s6, %s4
  $region1: #{conv2d_local_prepared.1} parent=0
    #allocation2 [shape = 'u8[73728]{0}', space=vmem, size = 0x12000, scoped, tag = 'input window, operand 0']
    #allocation3 [shape = 'u8[294912]{0}', space=vmem, size = 0x48000, scoped, tag = 'input window, operand 1']
    #allocation4 [shape = 'u8[16384]{0}', space=vmem, size = 0x4000, scoped, tag = 'output window, operand 0']
    loop: start=0, step=1, limit=4
    $region2: #{conv2d_local_prepared.1} parent=1 // loop_pre_header
      _
    $region3: #{conv2d_local_prepared.1} parent=1 // loop_header
      %s9 = sphi 0, %s13
      %p10 = scmp.ge.s32.totalorder %s9, 4
      %s19 = sphi 0, %s21
      %s22 = sphi 0, %s19
      %s23 = sphi 0, %s22
      %s39 = sphi 0, %s23
      %s45 = sphi 0, %s47
      %s48 = sphi 0, %s45
      %s49 = sphi 0, %s48
      %s65 = sphi 0, %s49
      %s71 = sphi 0, %s73
      %s74 = sphi 0, %s71
      %s75 = sphi 0, %s74
      %s91 = sphi 0, %s75
      %s97 = sphi 0, %s99
      %s100 = sphi 0, %s97
      %s101 = sphi 0, %s100
      %s117 = sphi 0, %s101
    $region4: #{conv2d_local_prepared.1} parent=1 // loop_header_branch
      %12 = sbr.rel (%p10) target = $region8
    $region5: #{conv2d_local_prepared.1} parent=1 // loop_body
      %s14 = ssub.s32 %s9, 1
      %s15 = ssub.s32 %s9, 2
      %s16 = sadd.s32 %s9, 1
      %s17 = ssub.s32 %s9, %s16
      %p18 = scmp.eq.s32.totalorder %s17, 0
      %s20 = sadd.s32 %s19, 1
      %s21 = scalar_select %p18, %s19, %s20
      %p24 = pneg %p18
      %p25 = scmp.eq.s32.totalorder %s9, 1
      %p26 = por %p24, %p25
      %p27 = scmp.ne.s32.totalorder %s19, %s22
      %p28 = scmp.eq.s32.totalorder %s9, 0
      %p29 = por %p27, %p28
      %p30 = scmp.ne.s32.totalorder %s19, %s22
      %p31 = scmp.eq.s32.totalorder %s14, 1
      %p32 = por %p30, %p31
      %p33 = scmp.ne.s32.totalorder %s22, %s23
      %p34 = scmp.eq.s32.totalorder %s14, 0
      %p35 = por %p33, %p34
      %p36 = scmp.ne.s32.totalorder %s22, %s23
      %p37 = scmp.eq.s32.totalorder %s15, 1
      %p38 = por %p36, %p37
      %p40 = scmp.ne.s32.totalorder %s23, %s39
      %p41 = scmp.eq.s32.totalorder %s15, 0
      %p42 = por %p40, %p41
      %s43 = ssub.s32 %s9, %s16
      %p44 = scmp.eq.s32.totalorder %s43, 0
      %s46 = sadd.s32 %s45, 1
      %s47 = scalar_select %p44, %s45, %s46
      %p50 = pneg %p44
      %p51 = scmp.eq.s32.totalorder %s9, 1
      %p52 = por %p50, %p51
      %p53 = scmp.ne.s32.totalorder %s45, %s48
      %p54 = scmp.eq.s32.totalorder %s9, 0
      %p55 = por %p53, %p54
      %p56 = scmp.ne.s32.totalorder %s45, %s48
      %p57 = scmp.eq.s32.totalorder %s14, 1
      %p58 = por %p56, %p57
      %p59 = scmp.ne.s32.totalorder %s48, %s49
      %p60 = scmp.eq.s32.totalorder %s14, 0
      %p61 = por %p59, %p60
      %p62 = scmp.ne.s32.totalorder %s48, %s49
      %p63 = scmp.eq.s32.totalorder %s15, 1
      %p64 = por %p62, %p63
      %p66 = scmp.ne.s32.totalorder %s49, %s65
      %p67 = scmp.eq.s32.totalorder %s15, 0
      %p68 = por %p66, %p67
      %s69 = ssub.s32 %s9, %s16
      %p70 = scmp.eq.s32.totalorder %s69, 0
      %s72 = sadd.s32 %s71, 1
      %s73 = scalar_select %p70, %s71, %s72
      %p76 = pneg %p70
      %p77 = scmp.eq.s32.totalorder %s9, 1
      %p78 = por %p76, %p77
      %p79 = scmp.ne.s32.totalorder %s71, %s74
      %p80 = scmp.eq.s32.totalorder %s9, 0
      %p81 = por %p79, %p80
      %p82 = scmp.ne.s32.totalorder %s71, %s74
      %p83 = scmp.eq.s32.totalorder %s14, 1
      %p84 = por %p82, %p83
      %p85 = scmp.ne.s32.totalorder %s74, %s75
      %p86 = scmp.eq.s32.totalorder %s14, 0
      %p87 = por %p85, %p86
      %p88 = scmp.ne.s32.totalorder %s74, %s75
      %p89 = scmp.eq.s32.totalorder %s15, 1
      %p90 = por %p88, %p89
      %p92 = scmp.ne.s32.totalorder %s75, %s91
      %p93 = scmp.eq.s32.totalorder %s15, 0
      %p94 = por %p92, %p93
      %s95 = ssub.s32 %s9, %s16
      %p96 = scmp.eq.s32.totalorder %s95, 0
      %s98 = sadd.s32 %s97, 1
      %s99 = scalar_select %p96, %s97, %s98
      %p102 = pneg %p96
      %p103 = scmp.eq.s32.totalorder %s9, 1
      %p104 = por %p102, %p103
      %p105 = scmp.ne.s32.totalorder %s97, %s100
      %p106 = scmp.eq.s32.totalorder %s9, 0
      %p107 = por %p105, %p106
      %p108 = scmp.ne.s32.totalorder %s97, %s100
      %p109 = scmp.eq.s32.totalorder %s14, 1
      %p110 = por %p108, %p109
      %p111 = scmp.ne.s32.totalorder %s100, %s101
      %p112 = scmp.eq.s32.totalorder %s14, 0
      %p113 = por %p111, %p112
      %p114 = scmp.ne.s32.totalorder %s100, %s101
      %p115 = scmp.eq.s32.totalorder %s15, 1
      %p116 = por %p114, %p115
      %p118 = scmp.ne.s32.totalorder %s101, %s117
      %p119 = scmp.eq.s32.totalorder %s15, 0
      %p120 = por %p118, %p119
      %p121 = scmp.le.s32.totalorder 1, %s9
      %p122 = scmp.lt.s32.totalorder %s9, 3
      %p123 = pnand %p121, %p122
      %p124 = pneg %p123
      // Predicated region
      $region9: #{conv2d_local_prepared.1} parent=5 // pred_check
        _
      $region10: #{conv2d_local_prepared.1} parent=5 // pred_check_branch
        %126 = sbr.rel (%p123) target = $region12
      $region11: #{conv2d_local_prepared.1} parent=5 // pred_region
        %s127 = ssub.s32 %s9, 1
      $region12: #{conv2d_local_prepared.1} parent=5 // pred_fallthru
        _
      %p128 = scmp.lt.s32.totalorder %s9, 2
      // Predicated region
      $region13: #{conv2d_local_prepared.1} parent=5 // pred_check
        %p129 = pneg %p128
      $region14: #{conv2d_local_prepared.1} parent=5 // pred_check_branch
        %131 = sbr.rel (%p129) target = $region16
      $region15: #{conv2d_local_prepared.1} parent=5 // pred_region
        // Predicated region
        $region17: #{conv2d_local_prepared.1} parent=15 // pred_check
          %p132 = pneg %p29
        $region18: #{conv2d_local_prepared.1} parent=15 // pred_check_branch
          %134 = sbr.rel (%p132) target = $region20
        $region19: #{conv2d_local_prepared.1} parent=15 // pred_region
          %s135 = sand.u32 %s19, 1
          %s136 = sand.u32 %s19, 1
          %s137 = smul.addr %s136, 72
          %s138 = scalar_lea.vmem [#allocation2], %s137
          %s139 = smul.addr %s9, 8
          %s140 = scalar_lea.vmem %s0, %s139
          // Predicated region
          $region21: #{conv2d_local_prepared.1} parent=19 // pred_check
            _
          $region22: #{conv2d_local_prepared.1} parent=19 // pred_check_branch
            %142 = sbr.rel (0) target = $region24
          $region23: #{conv2d_local_prepared.1} parent=19 // pred_region
            // Predicated region
            $region25: #{conv2d_local_prepared.1} parent=23 // pred_check
              _
            $region26: #{conv2d_local_prepared.1} parent=23 // pred_check_branch
              %144 = sbr.rel (0) target = $region28
            $region27: #{conv2d_local_prepared.1} parent=23 // pred_region
              // Predicated region
              $region40: #{conv2d_local_prepared.1} parent=27 // pred_check
                _
              $region41: #{conv2d_local_prepared.1} parent=27 // pred_check_branch
                %175 = sbr.rel (0) target = $region43
              $region42: #{conv2d_local_prepared.1} parent=27 // pred_region
                loop: start=0, step=1, limit=1
                $region44: #{conv2d_local_prepared.1} parent=42 // loop_pre_header
                  _
                $region45: #{conv2d_local_prepared.1} parent=42 // loop_header
                  %s177 = sphi 0, %s181
                  %p178 = scmp.ge.s32.totalorder %s177, 1
                  %s182 = sphi %s140, %s140
                  %s183 = sphi %s138, %s138
                $region46: #{conv2d_local_prepared.1} parent=42 // loop_header_branch
                  %180 = sbr.rel (%p178) target = $region50
                $region47: #{conv2d_local_prepared.1} parent=42 // loop_body
                  %v184 = vld [vmem:[%s182] sm:$0xff]
                  %185 = vst [vmem:[%s183] sm:$0xff] %v184
                  %v186 = vld [vmem:[%s182 + $0x10] sm:$0xff]
                  %187 = vst [vmem:[%s183 + $0x8] sm:$0xff] %v186
                  %v188 = vld [vmem:[%s182 + $0x20] sm:$0xff]
                  %189 = vst [vmem:[%s183 + $0x10] sm:$0xff] %v188
                  %v190 = vld [vmem:[%s182 + $0x30] sm:$0xff]
                  %191 = vst [vmem:[%s183 + $0x18] sm:$0xff] %v190
                  %v192 = vld [vmem:[%s182 + $0x40] sm:$0xff]
                  %193 = vst [vmem:[%s183 + $0x20] sm:$0xff] %v192
                  %v194 = vld [vmem:[%s182 + $0x50] sm:$0xff]
                  %195 = vst [vmem:[%s183 + $0x28] sm:$0xff] %v194
                  %v196 = vld [vmem:[%s182 + $0x60] sm:$0xff]
                  %197 = vst [vmem:[%s183 + $0x30] sm:$0xff] %v196
                  %v198 = vld [vmem:[%s182 + $0x70] sm:$0xff]
                  %199 = vst [vmem:[%s183 + $0x38] sm:$0xff] %v198
                  %v200 = vld [vmem:[%s182 + $0x80] sm:$0xff]
                  %201 = vst [vmem:[%s183 + $0x40] sm:$0xff] %v200
                $region48: #{conv2d_local_prepared.1} parent=42 // loop_footer
                  %s181 = sadd.s32 1, %s177
                $region49: #{conv2d_local_prepared.1} parent=42 // loop_footer_branch
                  %176 = sbr.rel target = $region45
                $region50: #{conv2d_local_prepared.1} parent=42 // loop_exit
                  _
              $region43: #{conv2d_local_prepared.1} parent=27 // pred_fallthru
                _
              // Predicated region
              $region51: #{conv2d_local_prepared.1} parent=27 // pred_check
                _
              $region52: #{conv2d_local_prepared.1} parent=27 // pred_check_branch
                %203 = sbr.rel target = $region54
              $region53: #{conv2d_local_prepared.1} parent=27 // pred_region
                _
              $region54: #{conv2d_local_prepared.1} parent=27 // pred_fallthru
                _
            $region28: #{conv2d_local_prepared.1} parent=23 // pred_fallthru
              _
            // Predicated region
            $region29: #{conv2d_local_prepared.1} parent=23 // pred_check
              _
            $region30: #{conv2d_local_prepared.1} parent=23 // pred_check_branch
              %146 = sbr.rel target = $region32
            $region31: #{conv2d_local_prepared.1} parent=23 // pred_region
              loop: start=0, step=1, limit=1
              $region33: #{conv2d_local_prepared.1} parent=31 // loop_pre_header
                _
              $region34: #{conv2d_local_prepared.1} parent=31 // loop_header
                %s149 = sphi 0, %s153
                %p150 = scmp.ge.s32.totalorder %s149, 1
                %s154 = sphi %s140, %s140
                %s155 = sphi %s138, %s138
              $region35: #{conv2d_local_prepared.1} parent=31 // loop_header_branch
                %152 = sbr.rel (%p150) target = $region39
              $region36: #{conv2d_local_prepared.1} parent=31 // loop_body
                %v156 = vld [vmem:[%s154] sm:$0xff]
                %157 = vst [vmem:[%s155] sm:$0xff] %v156
                %v158 = vld [vmem:[%s154 + $0x10] sm:$0xff]
                %159 = vst [vmem:[%s155 + $0x8] sm:$0xff] %v158
                %v160 = vld [vmem:[%s154 + $0x20] sm:$0xff]
                %161 = vst [vmem:[%s155 + $0x10] sm:$0xff] %v160
                %v162 = vld [vmem:[%s154 + $0x30] sm:$0xff]
                %163 = vst [vmem:[%s155 + $0x18] sm:$0xff] %v162
                %v164 = vld [vmem:[%s154 + $0x40] sm:$0xff]
                %165 = vst [vmem:[%s155 + $0x20] sm:$0xff] %v164
                %v166 = vld [vmem:[%s154 + $0x50] sm:$0xff]
                %167 = vst [vmem:[%s155 + $0x28] sm:$0xff] %v166
                %v168 = vld [vmem:[%s154 + $0x60] sm:$0xff]
                %169 = vst [vmem:[%s155 + $0x30] sm:$0xff] %v168
                %v170 = vld [vmem:[%s154 + $0x70] sm:$0xff]
                %171 = vst [vmem:[%s155 + $0x38] sm:$0xff] %v170
                %v172 = vld [vmem:[%s154 + $0x80] sm:$0xff]
                %173 = vst [vmem:[%s155 + $0x40] sm:$0xff] %v172
              $region37: #{conv2d_local_prepared.1} parent=31 // loop_footer
                %s153 = sadd.s32 1, %s149
              $region38: #{conv2d_local_prepared.1} parent=31 // loop_footer_branch
                %148 = sbr.rel target = $region34
              $region39: #{conv2d_local_prepared.1} parent=31 // loop_exit
                _
            $region32: #{conv2d_local_prepared.1} parent=23 // pred_fallthru
              _
          $region24: #{conv2d_local_prepared.1} parent=19 // pred_fallthru
            _
          %204 = vnop
        $region20: #{conv2d_local_prepared.1} parent=15 // pred_fallthru
          _
        // Predicated region
        $region55: #{conv2d_local_prepared.1} parent=15 // pred_check
          %p205 = pneg %p55
        $region56: #{conv2d_local_prepared.1} parent=15 // pred_check_branch
          %207 = sbr.rel (%p205) target = $region58
        $region57: #{conv2d_local_prepared.1} parent=15 // pred_region
          %s208 = sand.u32 %s45, 1
          %s209 = sand.u32 %s45, 1
          %s210 = smul.addr %s209, 288
          %s211 = scalar_lea.vmem [#allocation3], %s210
          %s212 = smul.addr %s9, 8
          %s213 = scalar_lea.vmem %s1, %s212
          // Predicated region
          $region59: #{conv2d_local_prepared.1} parent=57 // pred_check
            _
          $region60: #{conv2d_local_prepared.1} parent=57 // pred_check_branch
            %215 = sbr.rel (0) target = $region62
          $region61: #{conv2d_local_prepared.1} parent=57 // pred_region
            // Predicated region
            $region63: #{conv2d_local_prepared.1} parent=61 // pred_check
              _
            $region64: #{conv2d_local_prepared.1} parent=61 // pred_check_branch
              %217 = sbr.rel (0) target = $region66
            $region65: #{conv2d_local_prepared.1} parent=61 // pred_region
              // Predicated region
              $region78: #{conv2d_local_prepared.1} parent=65 // pred_check
                _
              $region79: #{conv2d_local_prepared.1} parent=65 // pred_check_branch
                %302 = sbr.rel (0) target = $region81
              $region80: #{conv2d_local_prepared.1} parent=65 // pred_region
                loop: start=0, step=1, limit=1
                $region82: #{conv2d_local_prepared.1} parent=80 // loop_pre_header
                  _
                $region83: #{conv2d_local_prepared.1} parent=80 // loop_header
                  %s304 = sphi 0, %s308
                  %p305 = scmp.ge.s32.totalorder %s304, 1
                  %s309 = sphi %s213, %s213
                  %s310 = sphi %s211, %s211
                $region84: #{conv2d_local_prepared.1} parent=80 // loop_header_branch
                  %307 = sbr.rel (%p305) target = $region88
                $region85: #{conv2d_local_prepared.1} parent=80 // loop_body
                  %v311 = vld [vmem:[%s309] sm:$0xff]
                  %312 = vst [vmem:[%s310] sm:$0xff] %v311
                  %v313 = vld [vmem:[%s309 + $0x10] sm:$0xff]
                  %314 = vst [vmem:[%s310 + $0x8] sm:$0xff] %v313
                  %v315 = vld [vmem:[%s309 + $0x20] sm:$0xff]
                  %316 = vst [vmem:[%s310 + $0x10] sm:$0xff] %v315
                  %v317 = vld [vmem:[%s309 + $0x30] sm:$0xff]
                  %318 = vst [vmem:[%s310 + $0x18] sm:$0xff] %v317
                  %v319 = vld [vmem:[%s309 + $0x40] sm:$0xff]
                  %320 = vst [vmem:[%s310 + $0x20] sm:$0xff] %v319
                  %v321 = vld [vmem:[%s309 + $0x50] sm:$0xff]
                  %322 = vst [vmem:[%s310 + $0x28] sm:$0xff] %v321
                  %v323 = vld [vmem:[%s309 + $0x60] sm:$0xff]
                  %324 = vst [vmem:[%s310 + $0x30] sm:$0xff] %v323
                  %v325 = vld [vmem:[%s309 + $0x70] sm:$0xff]
                  %326 = vst [vmem:[%s310 + $0x38] sm:$0xff] %v325
                  %v327 = vld [vmem:[%s309 + $0x80] sm:$0xff]
                  %328 = vst [vmem:[%s310 + $0x40] sm:$0xff] %v327
                  %v329 = vld [vmem:[%s309 + $0x90] sm:$0xff]
                  %330 = vst [vmem:[%s310 + $0x48] sm:$0xff] %v329
                  %v331 = vld [vmem:[%s309 + $0xa0] sm:$0xff]
                  %332 = vst [vmem:[%s310 + $0x50] sm:$0xff] %v331
                  %v333 = vld [vmem:[%s309 + $0xb0] sm:$0xff]
                  %334 = vst [vmem:[%s310 + $0x58] sm:$0xff] %v333
                  %v335 = vld [vmem:[%s309 + $0xc0] sm:$0xff]
                  %336 = vst [vmem:[%s310 + $0x60] sm:$0xff] %v335
                  %v337 = vld [vmem:[%s309 + $0xd0] sm:$0xff]
                  %338 = vst [vmem:[%s310 + $0x68] sm:$0xff] %v337
                  %v339 = vld [vmem:[%s309 + $0xe0] sm:$0xff]
                  %340 = vst [vmem:[%s310 + $0x70] sm:$0xff] %v339
                  %v341 = vld [vmem:[%s309 + $0xf0] sm:$0xff]
                  %342 = vst [vmem:[%s310 + $0x78] sm:$0xff] %v341
                  %v343 = vld [vmem:[%s309 + $0x100] sm:$0xff]
                  %344 = vst [vmem:[%s310 + $0x80] sm:$0xff] %v343
                  %v345 = vld [vmem:[%s309 + $0x110] sm:$0xff]
                  %346 = vst [vmem:[%s310 + $0x88] sm:$0xff] %v345
                  %v347 = vld [vmem:[%s309 + $0x120] sm:$0xff]
                  %348 = vst [vmem:[%s310 + $0x90] sm:$0xff] %v347
                  %v349 = vld [vmem:[%s309 + $0x130] sm:$0xff]
                  %350 = vst [vmem:[%s310 + $0x98] sm:$0xff] %v349
                  %v351 = vld [vmem:[%s309 + $0x140] sm:$0xff]
                  %352 = vst [vmem:[%s310 + $0xa0] sm:$0xff] %v351
                  %v353 = vld [vmem:[%s309 + $0x150] sm:$0xff]
                  %354 = vst [vmem:[%s310 + $0xa8] sm:$0xff] %v353
                  %v355 = vld [vmem:[%s309 + $0x160] sm:$0xff]
                  %356 = vst [vmem:[%s310 + $0xb0] sm:$0xff] %v355
                  %v357 = vld [vmem:[%s309 + $0x170] sm:$0xff]
                  %358 = vst [vmem:[%s310 + $0xb8] sm:$0xff] %v357
                  %v359 = vld [vmem:[%s309 + $0x180] sm:$0xff]
                  %360 = vst [vmem:[%s310 + $0xc0] sm:$0xff] %v359
                  %v361 = vld [vmem:[%s309 + $0x190] sm:$0xff]
                  %362 = vst [vmem:[%s310 + $0xc8] sm:$0xff] %v361
                  %v363 = vld [vmem:[%s309 + $0x1a0] sm:$0xff]
                  %364 = vst [vmem:[%s310 + $0xd0] sm:$0xff] %v363
                  %v365 = vld [vmem:[%s309 + $0x1b0] sm:$0xff]
                  %366 = vst [vmem:[%s310 + $0xd8] sm:$0xff] %v365
                  %v367 = vld [vmem:[%s309 + $0x1c0] sm:$0xff]
                  %368 = vst [vmem:[%s310 + $0xe0] sm:$0xff] %v367
                  %v369 = vld [vmem:[%s309 + $0x1d0] sm:$0xff]
                  %370 = vst [vmem:[%s310 + $0xe8] sm:$0xff] %v369
                  %v371 = vld [vmem:[%s309 + $0x1e0] sm:$0xff]
                  %372 = vst [vmem:[%s310 + $0xf0] sm:$0xff] %v371
                  %v373 = vld [vmem:[%s309 + $0x1f0] sm:$0xff]
                  %374 = vst [vmem:[%s310 + $0xf8] sm:$0xff] %v373
                  %v375 = vld [vmem:[%s309 + $0x200] sm:$0xff]
                  %376 = vst [vmem:[%s310 + $0x100] sm:$0xff] %v375
                  %v377 = vld [vmem:[%s309 + $0x210] sm:$0xff]
                  %378 = vst [vmem:[%s310 + $0x108] sm:$0xff] %v377
                  %v379 = vld [vmem:[%s309 + $0x220] sm:$0xff]
                  %380 = vst [vmem:[%s310 + $0x110] sm:$0xff] %v379
                  %v381 = vld [vmem:[%s309 + $0x230] sm:$0xff]
                  %382 = vst [vmem:[%s310 + $0x118] sm:$0xff] %v381
                $region86: #{conv2d_local_prepared.1} parent=80 // loop_footer
                  %s308 = sadd.s32 1, %s304
                $region87: #{conv2d_local_prepared.1} parent=80 // loop_footer_branch
                  %303 = sbr.rel target = $region83
                $region88: #{conv2d_local_prepared.1} parent=80 // loop_exit
                  _
              $region81: #{conv2d_local_prepared.1} parent=65 // pred_fallthru
                _
              // Predicated region
              $region89: #{conv2d_local_prepared.1} parent=65 // pred_check
                _
              $region90: #{conv2d_local_prepared.1} parent=65 // pred_check_branch
                %384 = sbr.rel target = $region92
              $region91: #{conv2d_local_prepared.1} parent=65 // pred_region
                _
              $region92: #{conv2d_local_prepared.1} parent=65 // pred_fallthru
                _
            $region66: #{conv2d_local_prepared.1} parent=61 // pred_fallthru
              _
            // Predicated region
            $region67: #{conv2d_local_prepared.1} parent=61 // pred_check
              _
            $region68: #{conv2d_local_prepared.1} parent=61 // pred_check_branch
              %219 = sbr.rel target = $region70
            $region69: #{conv2d_local_prepared.1} parent=61 // pred_region
              loop: start=0, step=1, limit=1
              $region71: #{conv2d_local_prepared.1} parent=69 // loop_pre_header
                _
              $region72: #{conv2d_local_prepared.1} parent=69 // loop_header
                %s222 = sphi 0, %s226
                %p223 = scmp.ge.s32.totalorder %s222, 1
                %s227 = sphi %s213, %s213
                %s228 = sphi %s211, %s211
              $region73: #{conv2d_local_prepared.1} parent=69 // loop_header_branch
                %225 = sbr.rel (%p223) target = $region77
              $region74: #{conv2d_local_prepared.1} parent=69 // loop_body
                %v229 = vld [vmem:[%s227] sm:$0xff]
                %230 = vst [vmem:[%s228] sm:$0xff] %v229
                %v231 = vld [vmem:[%s227 + $0x10] sm:$0xff]
                %232 = vst [vmem:[%s228 + $0x8] sm:$0xff] %v231
                %v233 = vld [vmem:[%s227 + $0x20] sm:$0xff]
                %234 = vst [vmem:[%s228 + $0x10] sm:$0xff] %v233
                %v235 = vld [vmem:[%s227 + $0x30] sm:$0xff]
                %236 = vst [vmem:[%s228 + $0x18] sm:$0xff] %v235
                %v237 = vld [vmem:[%s227 + $0x40] sm:$0xff]
                %238 = vst [vmem:[%s228 + $0x20] sm:$0xff] %v237
                %v239 = vld [vmem:[%s227 + $0x50] sm:$0xff]
                %240 = vst [vmem:[%s228 + $0x28] sm:$0xff] %v239
                %v241 = vld [vmem:[%s227 + $0x60] sm:$0xff]
                %242 = vst [vmem:[%s228 + $0x30] sm:$0xff] %v241
                %v243 = vld [vmem:[%s227 + $0x70] sm:$0xff]
                %244 = vst [vmem:[%s228 + $0x38] sm:$0xff] %v243
                %v245 = vld [vmem:[%s227 + $0x80] sm:$0xff]
                %246 = vst [vmem:[%s228 + $0x40] sm:$0xff] %v245
                %v247 = vld [vmem:[%s227 + $0x90] sm:$0xff]
                %248 = vst [vmem:[%s228 + $0x48] sm:$0xff] %v247
                %v249 = vld [vmem:[%s227 + $0xa0] sm:$0xff]
                %250 = vst [vmem:[%s228 + $0x50] sm:$0xff] %v249
                %v251 = vld [vmem:[%s227 + $0xb0] sm:$0xff]
                %252 = vst [vmem:[%s228 + $0x58] sm:$0xff] %v251
                %v253 = vld [vmem:[%s227 + $0xc0] sm:$0xff]
                %254 = vst [vmem:[%s228 + $0x60] sm:$0xff] %v253
                %v255 = vld [vmem:[%s227 + $0xd0] sm:$0xff]
                %256 = vst [vmem:[%s228 + $0x68] sm:$0xff] %v255
                %v257 = vld [vmem:[%s227 + $0xe0] sm:$0xff]
                %258 = vst [vmem:[%s228 + $0x70] sm:$0xff] %v257
                %v259 = vld [vmem:[%s227 + $0xf0] sm:$0xff]
                %260 = vst [vmem:[%s228 + $0x78] sm:$0xff] %v259
                %v261 = vld [vmem:[%s227 + $0x100] sm:$0xff]
                %262 = vst [vmem:[%s228 + $0x80] sm:$0xff] %v261
                %v263 = vld [vmem:[%s227 + $0x110] sm:$0xff]
                %264 = vst [vmem:[%s228 + $0x88] sm:$0xff] %v263
                %v265 = vld [vmem:[%s227 + $0x120] sm:$0xff]
                %266 = vst [vmem:[%s228 + $0x90] sm:$0xff] %v265
                %v267 = vld [vmem:[%s227 + $0x130] sm:$0xff]
                %268 = vst [vmem:[%s228 + $0x98] sm:$0xff] %v267
                %v269 = vld [vmem:[%s227 + $0x140] sm:$0xff]
                %270 = vst [vmem:[%s228 + $0xa0] sm:$0xff] %v269
                %v271 = vld [vmem:[%s227 + $0x150] sm:$0xff]
                %272 = vst [vmem:[%s228 + $0xa8] sm:$0xff] %v271
                %v273 = vld [vmem:[%s227 + $0x160] sm:$0xff]
                %274 = vst [vmem:[%s228 + $0xb0] sm:$0xff] %v273
                %v275 = vld [vmem:[%s227 + $0x170] sm:$0xff]
                %276 = vst [vmem:[%s228 + $0xb8] sm:$0xff] %v275
                %v277 = vld [vmem:[%s227 + $0x180] sm:$0xff]
                %278 = vst [vmem:[%s228 + $0xc0] sm:$0xff] %v277
                %v279 = vld [vmem:[%s227 + $0x190] sm:$0xff]
                %280 = vst [vmem:[%s228 + $0xc8] sm:$0xff] %v279
                %v281 = vld [vmem:[%s227 + $0x1a0] sm:$0xff]
                %282 = vst [vmem:[%s228 + $0xd0] sm:$0xff] %v281
                %v283 = vld [vmem:[%s227 + $0x1b0] sm:$0xff]
                %284 = vst [vmem:[%s228 + $0xd8] sm:$0xff] %v283
                %v285 = vld [vmem:[%s227 + $0x1c0] sm:$0xff]
                %286 = vst [vmem:[%s228 + $0xe0] sm:$0xff] %v285
                %v287 = vld [vmem:[%s227 + $0x1d0] sm:$0xff]
                %288 = vst [vmem:[%s228 + $0xe8] sm:$0xff] %v287
                %v289 = vld [vmem:[%s227 + $0x1e0] sm:$0xff]
                %290 = vst [vmem:[%s228 + $0xf0] sm:$0xff] %v289
                %v291 = vld [vmem:[%s227 + $0x1f0] sm:$0xff]
                %292 = vst [vmem:[%s228 + $0xf8] sm:$0xff] %v291
                %v293 = vld [vmem:[%s227 + $0x200] sm:$0xff]
                %294 = vst [vmem:[%s228 + $0x100] sm:$0xff] %v293
                %v295 = vld [vmem:[%s227 + $0x210] sm:$0xff]
                %296 = vst [vmem:[%s228 + $0x108] sm:$0xff] %v295
                %v297 = vld [vmem:[%s227 + $0x220] sm:$0xff]
                %298 = vst [vmem:[%s228 + $0x110] sm:$0xff] %v297
                %v299 = vld [vmem:[%s227 + $0x230] sm:$0xff]
                %300 = vst [vmem:[%s228 + $0x118] sm:$0xff] %v299
              $region75: #{conv2d_local_prepared.1} parent=69 // loop_footer
                %s226 = sadd.s32 1, %s222
              $region76: #{conv2d_local_prepared.1} parent=69 // loop_footer_branch
                %221 = sbr.rel target = $region72
              $region77: #{conv2d_local_prepared.1} parent=69 // loop_exit
                _
            $region70: #{conv2d_local_prepared.1} parent=61 // pred_fallthru
              _
          $region62: #{conv2d_local_prepared.1} parent=57 // pred_fallthru
            _
          %385 = vnop
        $region58: #{conv2d_local_prepared.1} parent=15 // pred_fallthru
          _
        // Predicated region
        $region93: #{conv2d_local_prepared.1} parent=15 // pred_check
          %p386 = pneg %p81
        $region94: #{conv2d_local_prepared.1} parent=15 // pred_check_branch
          %388 = sbr.rel (%p386) target = $region96
        $region95: #{conv2d_local_prepared.1} parent=15 // pred_region
          %p389 = scmp.lt.s32.totalorder %s9, 1
          %s390 = scalar_select %p389, %s9, 1
          %s391 = smul.addr %s390, 8
          %s392 = scalar_lea.vmem %s2, %s391
        $region96: #{conv2d_local_prepared.1} parent=15 // pred_fallthru
          _
      $region16: #{conv2d_local_prepared.1} parent=5 // pred_fallthru
        _
      %p393 = scmp.le.s32.totalorder 1, %s9
      %p394 = scmp.lt.s32.totalorder %s9, 3
      %p395 = pnand %p393, %p394
      %p396 = pneg %p395
      // Predicated region
      $region97: #{conv2d_local_prepared.1} parent=5 // pred_check
        _
      $region98: #{conv2d_local_prepared.1} parent=5 // pred_check_branch
        %398 = sbr.rel (%p395) target = $region100
      $region99: #{conv2d_local_prepared.1} parent=5 // pred_region
        %s399 = ssub.s32 %s9, 1
        %s400 = sand.u32 %s22, 1
        %s401 = sand.u32 %s22, 1
        %s402 = smul.addr %s401, 72
        %s403 = scalar_lea.vmem [#allocation2], %s402
        // Predicated region
        $region101: #{conv2d_local_prepared.1} parent=99 // pred_check
          %p404 = pneg %p35
        $region102: #{conv2d_local_prepared.1} parent=99 // pred_check_branch
          %406 = sbr.rel (%p404) target = $region104
        $region103: #{conv2d_local_prepared.1} parent=99 // pred_region
          _
        $region104: #{conv2d_local_prepared.1} parent=99 // pred_fallthru
          _
        %s407 = sand.u32 %s48, 1
        %s408 = sand.u32 %s48, 1
        %s409 = smul.addr %s408, 288
        %s410 = scalar_lea.vmem [#allocation3], %s409
        // Predicated region
        $region105: #{conv2d_local_prepared.1} parent=99 // pred_check
          %p411 = pneg %p61
        $region106: #{conv2d_local_prepared.1} parent=99 // pred_check_branch
          %413 = sbr.rel (%p411) target = $region108
        $region107: #{conv2d_local_prepared.1} parent=99 // pred_region
          _
        $region108: #{conv2d_local_prepared.1} parent=99 // pred_fallthru
          _
        %s414 = sand.u32 %s22, 1
        %s415 = sand.u32 %s22, 1
        %s416 = smul.addr %s415, 72
        %s417 = scalar_lea.vmem [#allocation2], %s416
        %p418 = pneg %p35
        %p419 = pneg %p32
        %s420 = sand.u32 %s48, 1
        %s421 = sand.u32 %s48, 1
        %s422 = smul.addr %s421, 288
        %s423 = scalar_lea.vmem [#allocation3], %s422
        %p424 = pneg %p61
        %p425 = pneg %p58
        %p426 = scmp.lt.s32.totalorder %s14, 1
        %s427 = scalar_select %p426, %s14, 1
        %s428 = smul.addr %s427, 8
        %s429 = scalar_lea.vmem %s2, %s428
        %p430 = pneg %p87
        %p431 = pneg %p84
        %p432 = pneg %p113
        %p433 = pneg %p110
        %s434 = sand.u32 %s100, 1
        %s435 = sand.u32 %s100, 1
        %s436 = smul.addr %s435, 16
        %s437 = scalar_lea.vmem [#allocation4], %s436
        %p438 = scmp.lt.s32.totalorder %s14, 1
        %s439 = scalar_select %p438, %s14, 1
        %s440 = smul.addr %s439, 8
        %s441 = scalar_lea.vmem %s2, %s440
        %v442 = vld [vmem:[%s441] sm:$0xff]
        %v443 = vld [vmem:[%s410] sm:$0xff]
        %v444 = vld [vmem:[%s403] sm:$0x1]
        %v445 = vlaneseq
        %v446 = vshrl.u32 %v445, 7
        %v447 = vsub.s32 0, %v446
        %v448 = vrot.slane %v444, %v447
        %v449 = vmul.f32 %v448, %v443
        %v450 = vadd.f32 %v449, 0.0
        %v451 = vld [vmem:[%s403 + $0x24] sm:$0x1]
        %v452 = vlaneseq
        %v453 = vshrl.u32 %v452, 7
        %v454 = vsub.s32 0, %v453
        %v455 = vrot.slane %v451, %v454
        %v456 = vmul.f32 %v455, %v443
        %v457 = vadd.f32 %v456, 0.0
        %v458 = vld [vmem:[%s410 + $0x8] sm:$0xff]
        %v459 = vld [vmem:[%s403 + $0x1] sm:$0x1]
        %v460 = vlaneseq
        %v461 = vshrl.u32 %v460, 7
        %v462 = vsub.s32 0, %v461
        %v463 = vrot.slane %v459, %v462
        %v464 = vmul.f32 %v463, %v458
        %v465 = vadd.f32 %v450, %v464
        %v466 = vld [vmem:[%s403 + $0x25] sm:$0x1]
        %v467 = vlaneseq
        %v468 = vshrl.u32 %v467, 7
        %v469 = vsub.s32 0, %v468
        %v470 = vrot.slane %v466, %v469
        %v471 = vmul.f32 %v470, %v458
        %v472 = vadd.f32 %v457, %v471
        %v473 = vld [vmem:[%s410 + $0x10] sm:$0xff]
        %v474 = vld [vmem:[%s403 + $0x2] sm:$0x1]
        %v475 = vlaneseq
        %v476 = vshrl.u32 %v475, 7
        %v477 = vsub.s32 0, %v476
        %v478 = vrot.slane %v474, %v477
        %v479 = vmul.f32 %v478, %v473
        %v480 = vadd.f32 %v465, %v479
        %v481 = vld [vmem:[%s403 + $0x26] sm:$0x1]
        %v482 = vlaneseq
        %v483 = vshrl.u32 %v482, 7
        %v484 = vsub.s32 0, %v483
        %v485 = vrot.slane %v481, %v484
        %v486 = vmul.f32 %v485, %v473
        %v487 = vadd.f32 %v472, %v486
        %v488 = vld [vmem:[%s410 + $0x18] sm:$0xff]
        %v489 = vld [vmem:[%s403 + $0x3] sm:$0x1]
        %v490 = vlaneseq
        %v491 = vshrl.u32 %v490, 7
        %v492 = vsub.s32 0, %v491
        %v493 = vrot.slane %v489, %v492
        %v494 = vmul.f32 %v493, %v488
        %v495 = vadd.f32 %v480, %v494
        %v496 = vld [vmem:[%s403 + $0x27] sm:$0x1]
        %v497 = vlaneseq
        %v498 = vshrl.u32 %v497, 7
        %v499 = vsub.s32 0, %v498
        %v500 = vrot.slane %v496, %v499
        %v501 = vmul.f32 %v500, %v488
        %v502 = vadd.f32 %v487, %v501
        %v503 = vld [vmem:[%s410 + $0x20] sm:$0xff]
        %v504 = vld [vmem:[%s403 + $0x4] sm:$0x1]
        %v505 = vlaneseq
        %v506 = vshrl.u32 %v505, 7
        %v507 = vsub.s32 0, %v506
        %v508 = vrot.slane %v504, %v507
        %v509 = vmul.f32 %v508, %v503
        %v510 = vadd.f32 %v495, %v509
        %v511 = vld [vmem:[%s403 + $0x28] sm:$0x1]
        %v512 = vlaneseq
        %v513 = vshrl.u32 %v512, 7
        %v514 = vsub.s32 0, %v513
        %v515 = vrot.slane %v511, %v514
        %v516 = vmul.f32 %v515, %v503
        %v517 = vadd.f32 %v502, %v516
        %v518 = vld [vmem:[%s410 + $0x28] sm:$0xff]
        %v519 = vld [vmem:[%s403 + $0x5] sm:$0x1]
        %v520 = vlaneseq
        %v521 = vshrl.u32 %v520, 7
        %v522 = vsub.s32 0, %v521
        %v523 = vrot.slane %v519, %v522
        %v524 = vmul.f32 %v523, %v518
        %v525 = vadd.f32 %v510, %v524
        %v526 = vld [vmem:[%s403 + $0x29] sm:$0x1]
        %v527 = vlaneseq
        %v528 = vshrl.u32 %v527, 7
        %v529 = vsub.s32 0, %v528
        %v530 = vrot.slane %v526, %v529
        %v531 = vmul.f32 %v530, %v518
        %v532 = vadd.f32 %v517, %v531
        %v533 = vld [vmem:[%s410 + $0x30] sm:$0xff]
        %v534 = vld [vmem:[%s403 + $0x6] sm:$0x1]
        %v535 = vlaneseq
        %v536 = vshrl.u32 %v535, 7
        %v537 = vsub.s32 0, %v536
        %v538 = vrot.slane %v534, %v537
        %v539 = vmul.f32 %v538, %v533
        %v540 = vadd.f32 %v525, %v539
        %v541 = vld [vmem:[%s403 + $0x2a] sm:$0x1]
        %v542 = vlaneseq
        %v543 = vshrl.u32 %v542, 7
        %v544 = vsub.s32 0, %v543
        %v545 = vrot.slane %v541, %v544
        %v546 = vmul.f32 %v545, %v533
        %v547 = vadd.f32 %v532, %v546
        %v548 = vld [vmem:[%s410 + $0x38] sm:$0xff]
        %v549 = vld [vmem:[%s403 + $0x7] sm:$0x1]
        %v550 = vlaneseq
        %v551 = vshrl.u32 %v550, 7
        %v552 = vsub.s32 0, %v551
        %v553 = vrot.slane %v549, %v552
        %v554 = vmul.f32 %v553, %v548
        %v555 = vadd.f32 %v540, %v554
        %v556 = vld [vmem:[%s403 + $0x2b] sm:$0x1]
        %v557 = vlaneseq
        %v558 = vshrl.u32 %v557, 7
        %v559 = vsub.s32 0, %v558
        %v560 = vrot.slane %v556, %v559
        %v561 = vmul.f32 %v560, %v548
        %v562 = vadd.f32 %v547, %v561
        %v563 = vld [vmem:[%s410 + $0x40] sm:$0xff]
        %v564 = vld [vmem:[%s403 + $0x8] sm:$0x1]
        %v565 = vlaneseq
        %v566 = vshrl.u32 %v565, 7
        %v567 = vsub.s32 0, %v566
        %v568 = vrot.slane %v564, %v567
        %v569 = vmul.f32 %v568, %v563
        %v570 = vadd.f32 %v555, %v569
        %v571 = vld [vmem:[%s403 + $0x2c] sm:$0x1]
        %v572 = vlaneseq
        %v573 = vshrl.u32 %v572, 7
        %v574 = vsub.s32 0, %v573
        %v575 = vrot.slane %v571, %v574
        %v576 = vmul.f32 %v575, %v563
        %v577 = vadd.f32 %v562, %v576
        %v578 = vld [vmem:[%s410 + $0x48] sm:$0xff]
        %v579 = vld [vmem:[%s403 + $0x9] sm:$0x1]
        %v580 = vlaneseq
        %v581 = vshrl.u32 %v580, 7
        %v582 = vsub.s32 0, %v581
        %v583 = vrot.slane %v579, %v582
        %v584 = vmul.f32 %v583, %v578
        %v585 = vadd.f32 %v570, %v584
        %v586 = vld [vmem:[%s403 + $0x2d] sm:$0x1]
        %v587 = vlaneseq
        %v588 = vshrl.u32 %v587, 7
        %v589 = vsub.s32 0, %v588
        %v590 = vrot.slane %v586, %v589
        %v591 = vmul.f32 %v590, %v578
        %v592 = vadd.f32 %v577, %v591
        %v593 = vld [vmem:[%s410 + $0x50] sm:$0xff]
        %v594 = vld [vmem:[%s403 + $0xa] sm:$0x1]
        %v595 = vlaneseq
        %v596 = vshrl.u32 %v595, 7
        %v597 = vsub.s32 0, %v596
        %v598 = vrot.slane %v594, %v597
        %v599 = vmul.f32 %v598, %v593
        %v600 = vadd.f32 %v585, %v599
        %v601 = vld [vmem:[%s403 + $0x2e] sm:$0x1]
        %v602 = vlaneseq
        %v603 = vshrl.u32 %v602, 7
        %v604 = vsub.s32 0, %v603
        %v605 = vrot.slane %v601, %v604
        %v606 = vmul.f32 %v605, %v593
        %v607 = vadd.f32 %v592, %v606
        %v608 = vld [vmem:[%s410 + $0x58] sm:$0xff]
        %v609 = vld [vmem:[%s403 + $0xb] sm:$0x1]
        %v610 = vlaneseq
        %v611 = vshrl.u32 %v610, 7
        %v612 = vsub.s32 0, %v611
        %v613 = vrot.slane %v609, %v612
        %v614 = vmul.f32 %v613, %v608
        %v615 = vadd.f32 %v600, %v614
        %v616 = vld [vmem:[%s403 + $0x2f] sm:$0x1]
        %v617 = vlaneseq
        %v618 = vshrl.u32 %v617, 7
        %v619 = vsub.s32 0, %v618
        %v620 = vrot.slane %v616, %v619
        %v621 = vmul.f32 %v620, %v608
        %v622 = vadd.f32 %v607, %v621
        %v623 = vld [vmem:[%s410 + $0x60] sm:$0xff]
        %v624 = vld [vmem:[%s403 + $0xc] sm:$0x1]
        %v625 = vlaneseq
        %v626 = vshrl.u32 %v625, 7
        %v627 = vsub.s32 0, %v626
        %v628 = vrot.slane %v624, %v627
        %v629 = vmul.f32 %v628, %v623
        %v630 = vadd.f32 %v615, %v629
        %v631 = vld [vmem:[%s403 + $0x30] sm:$0x1]
        %v632 = vlaneseq
        %v633 = vshrl.u32 %v632, 7
        %v634 = vsub.s32 0, %v633
        %v635 = vrot.slane %v631, %v634
        %v636 = vmul.f32 %v635, %v623
        %v637 = vadd.f32 %v622, %v636
        %v638 = vld [vmem:[%s410 + $0x68] sm:$0xff]
        %v639 = vld [vmem:[%s403 + $0xd] sm:$0x1]
        %v640 = vlaneseq
        %v641 = vshrl.u32 %v640, 7
        %v642 = vsub.s32 0, %v641
        %v643 = vrot.slane %v639, %v642
        %v644 = vmul.f32 %v643, %v638
        %v645 = vadd.f32 %v630, %v644
        %v646 = vld [vmem:[%s403 + $0x31] sm:$0x1]
        %v647 = vlaneseq
        %v648 = vshrl.u32 %v647, 7
        %v649 = vsub.s32 0, %v648
        %v650 = vrot.slane %v646, %v649
        %v651 = vmul.f32 %v650, %v638
        %v652 = vadd.f32 %v637, %v651
        %v653 = vld [vmem:[%s410 + $0x70] sm:$0xff]
        %v654 = vld [vmem:[%s403 + $0xe] sm:$0x1]
        %v655 = vlaneseq
        %v656 = vshrl.u32 %v655, 7
        %v657 = vsub.s32 0, %v656
        %v658 = vrot.slane %v654, %v657
        %v659 = vmul.f32 %v658, %v653
        %v660 = vadd.f32 %v645, %v659
        %v661 = vld [vmem:[%s403 + $0x32] sm:$0x1]
        %v662 = vlaneseq
        %v663 = vshrl.u32 %v662, 7
        %v664 = vsub.s32 0, %v663
        %v665 = vrot.slane %v661, %v664
        %v666 = vmul.f32 %v665, %v653
        %v667 = vadd.f32 %v652, %v666
        %v668 = vld [vmem:[%s410 + $0x78] sm:$0xff]
        %v669 = vld [vmem:[%s403 + $0xf] sm:$0x1]
        %v670 = vlaneseq
        %v671 = vshrl.u32 %v670, 7
        %v672 = vsub.s32 0, %v671
        %v673 = vrot.slane %v669, %v672
        %v674 = vmul.f32 %v673, %v668
        %v675 = vadd.f32 %v660, %v674
        %v676 = vld [vmem:[%s403 + $0x33] sm:$0x1]
        %v677 = vlaneseq
        %v678 = vshrl.u32 %v677, 7
        %v679 = vsub.s32 0, %v678
        %v680 = vrot.slane %v676, %v679
        %v681 = vmul.f32 %v680, %v668
        %v682 = vadd.f32 %v667, %v681
        %v683 = vld [vmem:[%s410 + $0x80] sm:$0xff]
        %v684 = vld [vmem:[%s403 + $0x10] sm:$0x1]
        %v685 = vlaneseq
        %v686 = vshrl.u32 %v685, 7
        %v687 = vsub.s32 0, %v686
        %v688 = vrot.slane %v684, %v687
        %v689 = vmul.f32 %v688, %v683
        %v690 = vadd.f32 %v675, %v689
        %v691 = vld [vmem:[%s403 + $0x34] sm:$0x1]
        %v692 = vlaneseq
        %v693 = vshrl.u32 %v692, 7
        %v694 = vsub.s32 0, %v693
        %v695 = vrot.slane %v691, %v694
        %v696 = vmul.f32 %v695, %v683
        %v697 = vadd.f32 %v682, %v696
        %v698 = vld [vmem:[%s410 + $0x88] sm:$0xff]
        %v699 = vld [vmem:[%s403 + $0x11] sm:$0x1]
        %v700 = vlaneseq
        %v701 = vshrl.u32 %v700, 7
        %v702 = vsub.s32 0, %v701
        %v703 = vrot.slane %v699, %v702
        %v704 = vmul.f32 %v703, %v698
        %v705 = vadd.f32 %v690, %v704
        %v706 = vld [vmem:[%s403 + $0x35] sm:$0x1]
        %v707 = vlaneseq
        %v708 = vshrl.u32 %v707, 7
        %v709 = vsub.s32 0, %v708
        %v710 = vrot.slane %v706, %v709
        %v711 = vmul.f32 %v710, %v698
        %v712 = vadd.f32 %v697, %v711
        %v713 = vld [vmem:[%s410 + $0x90] sm:$0xff]
        %v714 = vld [vmem:[%s403 + $0x12] sm:$0x1]
        %v715 = vlaneseq
        %v716 = vshrl.u32 %v715, 7
        %v717 = vsub.s32 0, %v716
        %v718 = vrot.slane %v714, %v717
        %v719 = vmul.f32 %v718, %v713
        %v720 = vadd.f32 %v705, %v719
        %v721 = vld [vmem:[%s403 + $0x36] sm:$0x1]
        %v722 = vlaneseq
        %v723 = vshrl.u32 %v722, 7
        %v724 = vsub.s32 0, %v723
        %v725 = vrot.slane %v721, %v724
        %v726 = vmul.f32 %v725, %v713
        %v727 = vadd.f32 %v712, %v726
        %v728 = vld [vmem:[%s410 + $0x98] sm:$0xff]
        %v729 = vld [vmem:[%s403 + $0x13] sm:$0x1]
        %v730 = vlaneseq
        %v731 = vshrl.u32 %v730, 7
        %v732 = vsub.s32 0, %v731
        %v733 = vrot.slane %v729, %v732
        %v734 = vmul.f32 %v733, %v728
        %v735 = vadd.f32 %v720, %v734
        %v736 = vld [vmem:[%s403 + $0x37] sm:$0x1]
        %v737 = vlaneseq
        %v738 = vshrl.u32 %v737, 7
        %v739 = vsub.s32 0, %v738
        %v740 = vrot.slane %v736, %v739
        %v741 = vmul.f32 %v740, %v728
        %v742 = vadd.f32 %v727, %v741
        %v743 = vld [vmem:[%s410 + $0xa0] sm:$0xff]
        %v744 = vld [vmem:[%s403 + $0x14] sm:$0x1]
        %v745 = vlaneseq
        %v746 = vshrl.u32 %v745, 7
        %v747 = vsub.s32 0, %v746
        %v748 = vrot.slane %v744, %v747
        %v749 = vmul.f32 %v748, %v743
        %v750 = vadd.f32 %v735, %v749
        %v751 = vld [vmem:[%s403 + $0x38] sm:$0x1]
        %v752 = vlaneseq
        %v753 = vshrl.u32 %v752, 7
        %v754 = vsub.s32 0, %v753
        %v755 = vrot.slane %v751, %v754
        %v756 = vmul.f32 %v755, %v743
        %v757 = vadd.f32 %v742, %v756
        %v758 = vld [vmem:[%s410 + $0xa8] sm:$0xff]
        %v759 = vld [vmem:[%s403 + $0x15] sm:$0x1]
        %v760 = vlaneseq
        %v761 = vshrl.u32 %v760, 7
        %v762 = vsub.s32 0, %v761
        %v763 = vrot.slane %v759, %v762
        %v764 = vmul.f32 %v763, %v758
        %v765 = vadd.f32 %v750, %v764
        %v766 = vld [vmem:[%s403 + $0x39] sm:$0x1]
        %v767 = vlaneseq
        %v768 = vshrl.u32 %v767, 7
        %v769 = vsub.s32 0, %v768
        %v770 = vrot.slane %v766, %v769
        %v771 = vmul.f32 %v770, %v758
        %v772 = vadd.f32 %v757, %v771
        %v773 = vld [vmem:[%s410 + $0xb0] sm:$0xff]
        %v774 = vld [vmem:[%s403 + $0x16] sm:$0x1]
        %v775 = vlaneseq
        %v776 = vshrl.u32 %v775, 7
        %v777 = vsub.s32 0, %v776
        %v778 = vrot.slane %v774, %v777
        %v779 = vmul.f32 %v778, %v773
        %v780 = vadd.f32 %v765, %v779
        %v781 = vld [vmem:[%s403 + $0x3a] sm:$0x1]
        %v782 = vlaneseq
        %v783 = vshrl.u32 %v782, 7
        %v784 = vsub.s32 0, %v783
        %v785 = vrot.slane %v781, %v784
        %v786 = vmul.f32 %v785, %v773
        %v787 = vadd.f32 %v772, %v786
        %v788 = vld [vmem:[%s410 + $0xb8] sm:$0xff]
        %v789 = vld [vmem:[%s403 + $0x17] sm:$0x1]
        %v790 = vlaneseq
        %v791 = vshrl.u32 %v790, 7
        %v792 = vsub.s32 0, %v791
        %v793 = vrot.slane %v789, %v792
        %v794 = vmul.f32 %v793, %v788
        %v795 = vadd.f32 %v780, %v794
        %v796 = vld [vmem:[%s403 + $0x3b] sm:$0x1]
        %v797 = vlaneseq
        %v798 = vshrl.u32 %v797, 7
        %v799 = vsub.s32 0, %v798
        %v800 = vrot.slane %v796, %v799
        %v801 = vmul.f32 %v800, %v788
        %v802 = vadd.f32 %v787, %v801
        %v803 = vld [vmem:[%s410 + $0xc0] sm:$0xff]
        %v804 = vld [vmem:[%s403 + $0x18] sm:$0x1]
        %v805 = vlaneseq
        %v806 = vshrl.u32 %v805, 7
        %v807 = vsub.s32 0, %v806
        %v808 = vrot.slane %v804, %v807
        %v809 = vmul.f32 %v808, %v803
        %v810 = vadd.f32 %v795, %v809
        %v811 = vld [vmem:[%s403 + $0x3c] sm:$0x1]
        %v812 = vlaneseq
        %v813 = vshrl.u32 %v812, 7
        %v814 = vsub.s32 0, %v813
        %v815 = vrot.slane %v811, %v814
        %v816 = vmul.f32 %v815, %v803
        %v817 = vadd.f32 %v802, %v816
        %v818 = vld [vmem:[%s410 + $0xc8] sm:$0xff]
        %v819 = vld [vmem:[%s403 + $0x19] sm:$0x1]
        %v820 = vlaneseq
        %v821 = vshrl.u32 %v820, 7
        %v822 = vsub.s32 0, %v821
        %v823 = vrot.slane %v819, %v822
        %v824 = vmul.f32 %v823, %v818
        %v825 = vadd.f32 %v810, %v824
        %v826 = vld [vmem:[%s403 + $0x3d] sm:$0x1]
        %v827 = vlaneseq
        %v828 = vshrl.u32 %v827, 7
        %v829 = vsub.s32 0, %v828
        %v830 = vrot.slane %v826, %v829
        %v831 = vmul.f32 %v830, %v818
        %v832 = vadd.f32 %v817, %v831
        %v833 = vld [vmem:[%s410 + $0xd0] sm:$0xff]
        %v834 = vld [vmem:[%s403 + $0x1a] sm:$0x1]
        %v835 = vlaneseq
        %v836 = vshrl.u32 %v835, 7
        %v837 = vsub.s32 0, %v836
        %v838 = vrot.slane %v834, %v837
        %v839 = vmul.f32 %v838, %v833
        %v840 = vadd.f32 %v825, %v839
        %v841 = vld [vmem:[%s403 + $0x3e] sm:$0x1]
        %v842 = vlaneseq
        %v843 = vshrl.u32 %v842, 7
        %v844 = vsub.s32 0, %v843
        %v845 = vrot.slane %v841, %v844
        %v846 = vmul.f32 %v845, %v833
        %v847 = vadd.f32 %v832, %v846
        %v848 = vld [vmem:[%s410 + $0xd8] sm:$0xff]
        %v849 = vld [vmem:[%s403 + $0x1b] sm:$0x1]
        %v850 = vlaneseq
        %v851 = vshrl.u32 %v850, 7
        %v852 = vsub.s32 0, %v851
        %v853 = vrot.slane %v849, %v852
        %v854 = vmul.f32 %v853, %v848
        %v855 = vadd.f32 %v840, %v854
        %v856 = vld [vmem:[%s403 + $0x3f] sm:$0x1]
        %v857 = vlaneseq
        %v858 = vshrl.u32 %v857, 7
        %v859 = vsub.s32 0, %v858
        %v860 = vrot.slane %v856, %v859
        %v861 = vmul.f32 %v860, %v848
        %v862 = vadd.f32 %v847, %v861
        %v863 = vld [vmem:[%s410 + $0xe0] sm:$0xff]
        %v864 = vld [vmem:[%s403 + $0x1c] sm:$0x1]
        %v865 = vlaneseq
        %v866 = vshrl.u32 %v865, 7
        %v867 = vsub.s32 0, %v866
        %v868 = vrot.slane %v864, %v867
        %v869 = vmul.f32 %v868, %v863
        %v870 = vadd.f32 %v855, %v869
        %v871 = vld [vmem:[%s403 + $0x40] sm:$0x1]
        %v872 = vlaneseq
        %v873 = vshrl.u32 %v872, 7
        %v874 = vsub.s32 0, %v873
        %v875 = vrot.slane %v871, %v874
        %v876 = vmul.f32 %v875, %v863
        %v877 = vadd.f32 %v862, %v876
        %v878 = vld [vmem:[%s410 + $0xe8] sm:$0xff]
        %v879 = vld [vmem:[%s403 + $0x1d] sm:$0x1]
        %v880 = vlaneseq
        %v881 = vshrl.u32 %v880, 7
        %v882 = vsub.s32 0, %v881
        %v883 = vrot.slane %v879, %v882
        %v884 = vmul.f32 %v883, %v878
        %v885 = vadd.f32 %v870, %v884
        %v886 = vld [vmem:[%s403 + $0x41] sm:$0x1]
        %v887 = vlaneseq
        %v888 = vshrl.u32 %v887, 7
        %v889 = vsub.s32 0, %v888
        %v890 = vrot.slane %v886, %v889
        %v891 = vmul.f32 %v890, %v878
        %v892 = vadd.f32 %v877, %v891
        %v893 = vld [vmem:[%s410 + $0xf0] sm:$0xff]
        %v894 = vld [vmem:[%s403 + $0x1e] sm:$0x1]
        %v895 = vlaneseq
        %v896 = vshrl.u32 %v895, 7
        %v897 = vsub.s32 0, %v896
        %v898 = vrot.slane %v894, %v897
        %v899 = vmul.f32 %v898, %v893
        %v900 = vadd.f32 %v885, %v899
        %v901 = vld [vmem:[%s403 + $0x42] sm:$0x1]
        %v902 = vlaneseq
        %v903 = vshrl.u32 %v902, 7
        %v904 = vsub.s32 0, %v903
        %v905 = vrot.slane %v901, %v904
        %v906 = vmul.f32 %v905, %v893
        %v907 = vadd.f32 %v892, %v906
        %v908 = vld [vmem:[%s410 + $0xf8] sm:$0xff]
        %v909 = vld [vmem:[%s403 + $0x1f] sm:$0x1]
        %v910 = vlaneseq
        %v911 = vshrl.u32 %v910, 7
        %v912 = vsub.s32 0, %v911
        %v913 = vrot.slane %v909, %v912
        %v914 = vmul.f32 %v913, %v908
        %v915 = vadd.f32 %v900, %v914
        %v916 = vld [vmem:[%s403 + $0x43] sm:$0x1]
        %v917 = vlaneseq
        %v918 = vshrl.u32 %v917, 7
        %v919 = vsub.s32 0, %v918
        %v920 = vrot.slane %v916, %v919
        %v921 = vmul.f32 %v920, %v908
        %v922 = vadd.f32 %v907, %v921
        %v923 = vld [vmem:[%s410 + $0x100] sm:$0xff]
        %v924 = vld [vmem:[%s403 + $0x20] sm:$0x1]
        %v925 = vlaneseq
        %v926 = vshrl.u32 %v925, 7
        %v927 = vsub.s32 0, %v926
        %v928 = vrot.slane %v924, %v927
        %v929 = vmul.f32 %v928, %v923
        %v930 = vadd.f32 %v915, %v929
        %v931 = vld [vmem:[%s403 + $0x44] sm:$0x1]
        %v932 = vlaneseq
        %v933 = vshrl.u32 %v932, 7
        %v934 = vsub.s32 0, %v933
        %v935 = vrot.slane %v931, %v934
        %v936 = vmul.f32 %v935, %v923
        %v937 = vadd.f32 %v922, %v936
        %v938 = vld [vmem:[%s410 + $0x108] sm:$0xff]
        %v939 = vld [vmem:[%s403 + $0x21] sm:$0x1]
        %v940 = vlaneseq
        %v941 = vshrl.u32 %v940, 7
        %v942 = vsub.s32 0, %v941
        %v943 = vrot.slane %v939, %v942
        %v944 = vmul.f32 %v943, %v938
        %v945 = vadd.f32 %v930, %v944
        %v946 = vld [vmem:[%s403 + $0x45] sm:$0x1]
        %v947 = vlaneseq
        %v948 = vshrl.u32 %v947, 7
        %v949 = vsub.s32 0, %v948
        %v950 = vrot.slane %v946, %v949
        %v951 = vmul.f32 %v950, %v938
        %v952 = vadd.f32 %v937, %v951
        %v953 = vld [vmem:[%s410 + $0x110] sm:$0xff]
        %v954 = vld [vmem:[%s403 + $0x22] sm:$0x1]
        %v955 = vlaneseq
        %v956 = vshrl.u32 %v955, 7
        %v957 = vsub.s32 0, %v956
        %v958 = vrot.slane %v954, %v957
        %v959 = vmul.f32 %v958, %v953
        %v960 = vadd.f32 %v945, %v959
        %v961 = vld [vmem:[%s403 + $0x46] sm:$0x1]
        %v962 = vlaneseq
        %v963 = vshrl.u32 %v962, 7
        %v964 = vsub.s32 0, %v963
        %v965 = vrot.slane %v961, %v964
        %v966 = vmul.f32 %v965, %v953
        %v967 = vadd.f32 %v952, %v966
        %v968 = vld [vmem:[%s410 + $0x118] sm:$0xff]
        %v969 = vld [vmem:[%s403 + $0x23] sm:$0x1]
        %v970 = vlaneseq
        %v971 = vshrl.u32 %v970, 7
        %v972 = vsub.s32 0, %v971
        %v973 = vrot.slane %v969, %v972
        %v974 = vmul.f32 %v973, %v968
        %v975 = vadd.f32 %v960, %v974
        %v976 = vld [vmem:[%s403 + $0x47] sm:$0x1]
        %v977 = vlaneseq
        %v978 = vshrl.u32 %v977, 7
        %v979 = vsub.s32 0, %v978
        %v980 = vrot.slane %v976, %v979
        %v981 = vmul.f32 %v980, %v968
        %v982 = vadd.f32 %v967, %v981
        %v983 = vadd.f32 %v975, %v442
        %984 = vst [vmem:[%s437] sm:$0xff] %v983
        %v985 = vadd.f32 %v982, %v442
        %s986 = scalar_lea.vmem %s437, 8 [#allocation4]
        %987 = vst [vmem:[%s986] sm:$0xff] %v985
        %s988 = sand.u32 %s100, 1
        %s989 = sand.u32 %s100, 1
        %s990 = smul.addr %s989, 16
        %s991 = scalar_lea.vmem [#allocation4], %s990
        // Predicated region
        $region109: #{conv2d_local_prepared.1} parent=99 // pred_check
          %p992 = pneg %p110
        $region110: #{conv2d_local_prepared.1} parent=99 // pred_check_branch
          %994 = sbr.rel (%p992) target = $region112
        $region111: #{conv2d_local_prepared.1} parent=99 // pred_region
          %s995 = smul.addr %s14, 8
          %s996 = scalar_lea.vmem %s3, %s995
          // Predicated region
          $region113: #{conv2d_local_prepared.1} parent=111 // pred_check
            _
          $region114: #{conv2d_local_prepared.1} parent=111 // pred_check_branch
            %998 = sbr.rel (0) target = $region116
          $region115: #{conv2d_local_prepared.1} parent=111 // pred_region
            // Predicated region
            $region117: #{conv2d_local_prepared.1} parent=115 // pred_check
              _
            $region118: #{conv2d_local_prepared.1} parent=115 // pred_check_branch
              %1000 = sbr.rel (0) target = $region120
            $region119: #{conv2d_local_prepared.1} parent=115 // pred_region
              // Predicated region
              $region132: #{conv2d_local_prepared.1} parent=119 // pred_check
                _
              $region133: #{conv2d_local_prepared.1} parent=119 // pred_check_branch
                %1017 = sbr.rel (0) target = $region135
              $region134: #{conv2d_local_prepared.1} parent=119 // pred_region
                loop: start=0, step=1, limit=1
                $region136: #{conv2d_local_prepared.1} parent=134 // loop_pre_header
                  _
                $region137: #{conv2d_local_prepared.1} parent=134 // loop_header
                  %s1019 = sphi 0, %s1023
                  %p1020 = scmp.ge.s32.totalorder %s1019, 1
                  %s1024 = sphi %s991, %s991
                  %s1025 = sphi %s996, %s996
                $region138: #{conv2d_local_prepared.1} parent=134 // loop_header_branch
                  %1022 = sbr.rel (%p1020) target = $region142
                $region139: #{conv2d_local_prepared.1} parent=134 // loop_body
                  %v1026 = vld [vmem:[%s1024] sm:$0xff]
                  %1027 = vst [vmem:[%s1025] sm:$0xff] %v1026
                  %v1028 = vld [vmem:[%s1024 + $0x8] sm:$0xff]
                  %1029 = vst [vmem:[%s1025 + $0x10] sm:$0xff] %v1028
                $region140: #{conv2d_local_prepared.1} parent=134 // loop_footer
                  %s1023 = sadd.s32 1, %s1019
                $region141: #{conv2d_local_prepared.1} parent=134 // loop_footer_branch
                  %1018 = sbr.rel target = $region137
                $region142: #{conv2d_local_prepared.1} parent=134 // loop_exit
                  _
              $region135: #{conv2d_local_prepared.1} parent=119 // pred_fallthru
                _
              // Predicated region
              $region143: #{conv2d_local_prepared.1} parent=119 // pred_check
                _
              $region144: #{conv2d_local_prepared.1} parent=119 // pred_check_branch
                %1031 = sbr.rel target = $region146
              $region145: #{conv2d_local_prepared.1} parent=119 // pred_region
                _
              $region146: #{conv2d_local_prepared.1} parent=119 // pred_fallthru
                _
            $region120: #{conv2d_local_prepared.1} parent=115 // pred_fallthru
              _
            // Predicated region
            $region121: #{conv2d_local_prepared.1} parent=115 // pred_check
              _
            $region122: #{conv2d_local_prepared.1} parent=115 // pred_check_branch
              %1002 = sbr.rel target = $region124
            $region123: #{conv2d_local_prepared.1} parent=115 // pred_region
              loop: start=0, step=1, limit=1
              $region125: #{conv2d_local_prepared.1} parent=123 // loop_pre_header
                _
              $region126: #{conv2d_local_prepared.1} parent=123 // loop_header
                %s1005 = sphi 0, %s1009
                %p1006 = scmp.ge.s32.totalorder %s1005, 1
                %s1010 = sphi %s991, %s991
                %s1011 = sphi %s996, %s996
              $region127: #{conv2d_local_prepared.1} parent=123 // loop_header_branch
                %1008 = sbr.rel (%p1006) target = $region131
              $region128: #{conv2d_local_prepared.1} parent=123 // loop_body
                %v1012 = vld [vmem:[%s1010] sm:$0xff]
                %1013 = vst [vmem:[%s1011] sm:$0xff] %v1012
                %v1014 = vld [vmem:[%s1010 + $0x8] sm:$0xff]
                %1015 = vst [vmem:[%s1011 + $0x10] sm:$0xff] %v1014
              $region129: #{conv2d_local_prepared.1} parent=123 // loop_footer
                %s1009 = sadd.s32 1, %s1005
              $region130: #{conv2d_local_prepared.1} parent=123 // loop_footer_branch
                %1004 = sbr.rel target = $region126
              $region131: #{conv2d_local_prepared.1} parent=123 // loop_exit
                _
            $region124: #{conv2d_local_prepared.1} parent=115 // pred_fallthru
              _
          $region116: #{conv2d_local_prepared.1} parent=111 // pred_fallthru
            _
          %1032 = vnop
        $region112: #{conv2d_local_prepared.1} parent=99 // pred_fallthru
          _
      $region100: #{conv2d_local_prepared.1} parent=5 // pred_fallthru
        _
      %p1033 = scmp.le.s32.totalorder 2, %s9
      // Predicated region
      $region147: #{conv2d_local_prepared.1} parent=5 // pred_check
        %p1034 = pneg %p1033
      $region148: #{conv2d_local_prepared.1} parent=5 // pred_check_branch
        %1036 = sbr.rel (%p1034) target = $region150
      $region149: #{conv2d_local_prepared.1} parent=5 // pred_region
        %s1037 = ssub.s32 %s9, 2
        // Predicated region
        $region151: #{conv2d_local_prepared.1} parent=149 // pred_check
          %p1038 = pneg %p116
        $region152: #{conv2d_local_prepared.1} parent=149 // pred_check_branch
          %1040 = sbr.rel (%p1038) target = $region154
        $region153: #{conv2d_local_prepared.1} parent=149 // pred_region
          %s1041 = sand.u32 %s101, 1
          %s1042 = sand.u32 %s101, 1
          %s1043 = smul.addr %s1042, 16
          %s1044 = scalar_lea.vmem [#allocation4], %s1043
        $region154: #{conv2d_local_prepared.1} parent=149 // pred_fallthru
          _
      $region150: #{conv2d_local_prepared.1} parent=5 // pred_fallthru
        _
    $region6: #{conv2d_local_prepared.1} parent=1 // loop_footer
      %s13 = sadd.s32 1, %s9
    $region7: #{conv2d_local_prepared.1} parent=1 // loop_footer_branch
      %8 = sbr.rel target = $region3
    $region8: #{conv2d_local_prepared.1} parent=1 // loop_exit
      _

</llo_original>
